<compile_context>
chip_gen: v7x
topology: tpu7x:2x2x1
jax: 0.10.0
libtpu: 0.0.40
codegen_flags: <defaults>
</compile_context>

<pallas_src>
import functools

import jax
import jax.numpy as jnp
from jax.experimental import pallas as pl
from jax.experimental.pallas import tpu as pltpu


_VMEM_LIMIT = 48 * 1024 * 1024  # fits under v7x's 64 MiB physical VMEM with headroom


def _pick_tile(dim, target, align):
    """Largest divisor of `dim` that is a multiple of `align` and <= target, else full dim."""
    if dim <= target:
        return dim
    t = (target // align) * align
    while t >= align:
        if dim % t == 0:
            return t
        t -= align
    return dim


# ----------------------------- Pallas kernels -----------------------------

def _dense_kernel(x_ref, w_ref, b_ref, o_ref, acc_ref, *, act):
    """Tiled y = x @ w + b with optional fused activation. bf16 MXU inputs, f32 acc."""
    @pl.when(pl.program_id(2) == 0)
    def _init():
        acc_ref[...] = jnp.zeros_like(acc_ref)

    acc_ref[...] += jnp.dot(x_ref[...], w_ref[...],
                            preferred_element_type=jnp.float32)

    @pl.when(pl.program_id(2) == pl.num_programs(2) - 1)
    def _finish():
        y = acc_ref[...] + b_ref[...]
        if act == "gelu":
            # TODO(synk): HF BERT uses erf-GELU; tanh approximation used here.
            y = 0.5 * y * (1.0 + jnp.tanh(0.7978845608028654
                                          * (y + 0.044715 * y * y * y)))
        o_ref[...] = y.astype(o_ref.dtype)


def dense_bias_act(x, w, b, act="none", tm=256, tn=256, tk=512):
    M, K = x.shape
    N = w.shape[1]
    tm = _pick_tile(M, tm, 8)
    tn = _pick_tile(N, tn, 128)
    tk = _pick_tile(K, tk, 128)
    return pl.pallas_call(
        functools.partial(_dense_kernel, act=act),
        out_shape=jax.ShapeDtypeStruct((M, N), jnp.bfloat16),
        grid=(M // tm, N // tn, K // tk),
        in_specs=[
            pl.BlockSpec((tm, tk), lambda i, j, k: (i, k)),
            pl.BlockSpec((tk, tn), lambda i, j, k: (k, j)),
            pl.BlockSpec((1, tn), lambda i, j, k: (0, j)),
        ],
        out_specs=pl.BlockSpec((tm, tn), lambda i, j, k: (i, j)),
        scratch_shapes=[pltpu.VMEM((tm, tn), jnp.float32)],
        compiler_params=pltpu.CompilerParams(
            dimension_semantics=("parallel", "parallel", "arbitrary"),
            vmem_limit_bytes=_VMEM_LIMIT),
    )(x, w, b.reshape(1, N))


def _dense_ln_kernel(x_ref, w_ref, b_ref, r_ref, g_ref, bt_ref, o_ref, acc_ref, *, eps):
    """Tiled y = x @ w + b; epilogue fuses residual add + LayerNorm (f32 math)."""
    @pl.when(pl.program_id(1) == 0)
    def _init():
        acc_ref[...] = jnp.zeros_like(acc_ref)

    acc_ref[...] += jnp.dot(x_ref[...], w_ref[...],
                            preferred_element_type=jnp.float32)

    @pl.when(pl.program_id(1) == pl.num_programs(1) - 1)
    def _finish():
        y = acc_ref[...] + b_ref[...] + r_ref[...].astype(jnp.float32)
        mu = jnp.mean(y, axis=-1, keepdims=True)
        yc = y - mu
        var = jnp.mean(yc * yc, axis=-1, keepdims=True)
        inv = jax.lax.rsqrt(var + eps)
        o_ref[...] = (yc * inv * g_ref[...] + bt_ref[...]).astype(o_ref.dtype)


def dense_residual_ln(x, w, b, residual, gamma, beta, eps=1e-12, tm=256, tk=512):
    M, K = x.shape
    N = w.shape[1]          # full hidden width stays in one lane-dense tile
    tm = _pick_tile(M, tm, 8)
    tk = _pick_tile(K, tk, 128)
    return pl.pallas_call(
        functools.partial(_dense_ln_kernel, eps=eps),
        out_shape=jax.ShapeDtypeStruct((M, N), jnp.bfloat16),
        grid=(M // tm, K // tk),
        in_specs=[
            pl.BlockSpec((tm, tk), lambda i, k: (i, k)),
            pl.BlockSpec((tk, N), lambda i, k: (k, 0)),
            pl.BlockSpec((1, N), lambda i, k: (0, 0)),
            pl.BlockSpec((tm, N), lambda i, k: (i, 0)),
            pl.BlockSpec((1, N), lambda i, k: (0, 0)),
            pl.BlockSpec((1, N), lambda i, k: (0, 0)),
        ],
        out_specs=pl.BlockSpec((tm, N), lambda i, k: (i, 0)),
        scratch_shapes=[pltpu.VMEM((tm, N), jnp.float32)],
        compiler_params=pltpu.CompilerParams(
            dimension_semantics=("parallel", "arbitrary"),
            vmem_limit_bytes=_VMEM_LIMIT),
    )(x, w, b.reshape(1, N), residual, gamma.reshape(1, N), beta.reshape(1, N))


def _ln_kernel(x_ref, g_ref, b_ref, o_ref, *, eps):
    """Row-tiled LayerNorm (used for the embedding LN, which has no preceding matmul)."""
    x = x_ref[...].astype(jnp.float32)
    mu = jnp.mean(x, axis=-1, keepdims=True)
    xc = x - mu
    var = jnp.mean(xc * xc, axis=-1, keepdims=True)
    inv = jax.lax.rsqrt(var + eps)
    o_ref[...] = (xc * inv * g_ref[...] + b_ref[...]).astype(o_ref.dtype)


def layernorm(x, gamma, beta, eps=1e-12, tm=512):
    M, H = x.shape
    tm = _pick_tile(M, tm, 8)
    return pl.pallas_call(
        functools.partial(_ln_kernel, eps=eps),
        out_shape=jax.ShapeDtypeStruct((M, H), jnp.bfloat16),
        grid=(M // tm,),
        in_specs=[
            pl.BlockSpec((tm, H), lambda i: (i, 0)),
            pl.BlockSpec((1, H), lambda i: (0, 0)),
            pl.BlockSpec((1, H), lambda i: (0, 0)),
        ],
        out_specs=pl.BlockSpec((tm, H), lambda i: (i, 0)),
        compiler_params=pltpu.CompilerParams(
            dimension_semantics=("parallel",),
            vmem_limit_bytes=_VMEM_LIMIT),
    )(x, gamma.reshape(1, H), beta.reshape(1, H))


def _attention_kernel(qkv_ref, bias_ref, o_ref, *, n_heads, d_head, scale):
    """Per batch: consume packed [S, 3H] QKV, softmax(QK^T*scale + mask) @ V per head,
    write merged-head [S, H] context directly (no wrapper transposes)."""
    qkv = qkv_ref[0]                 # (S, 3H) bf16
    bias = bias_ref[0]               # (1, S) f32 additive mask, broadcast over rows
    H = n_heads * d_head
    outs = []
    for h in range(n_heads):         # static head loop; slices are static (zero-cost views)
        q = qkv[:, h * d_head:(h + 1) * d_head]
        k = qkv[:, H + h * d_head:H + (h + 1) * d_head]
        v = qkv[:, 2 * H + h * d_head:2 * H + (h + 1) * d_head]
        s = jax.lax.dot_general(q, k, (((1,), (1,)), ((), ())),
                                preferred_element_type=jnp.float32) * scale
        s = s + bias
        s = s - jnp.max(s, axis=-1, keepdims=True)
        p = jnp.exp(s)
        p = p * pl.reciprocal(jnp.sum(p, axis=-1, keepdims=True), approx=True)
        outs.append(jnp.dot(p.astype(qkv.dtype), v,
                            preferred_element_type=jnp.float32))
    o_ref[0] = jnp.concatenate(outs, axis=-1).astype(o_ref.dtype)


def attention(qkv, mask_bias, n_heads, d_head):
    # TODO(synk): for long sequences convert to a flash-style kv-blocked loop; the
    # per-batch S x S logits tile is fine at these shapes.
    B, S, threeH = qkv.shape
    H = n_heads * d_head
    scale = 1.0 / (d_head ** 0.5)
    return pl.pallas_call(
        functools.partial(_attention_kernel, n_heads=n_heads, d_head=d_head, scale=scale),
        out_shape=jax.ShapeDtypeStruct((B, S, H), jnp.bfloat16),
        grid=(B,),
        in_specs=[
            pl.BlockSpec((1, S, threeH), lambda b: (b, 0, 0)),
            pl.BlockSpec((1, 1, S), lambda b: (b, 0, 0)),
        ],
        out_specs=pl.BlockSpec((1, S, H), lambda b: (b, 0, 0)),
        compiler_params=pltpu.CompilerParams(
            dimension_semantics=("parallel",),
            vmem_limit_bytes=_VMEM_LIMIT),
    )(qkv, mask_bias)


def _pooler_cls_kernel(x_ref, wp_ref, bp_ref, wc_ref, bc_ref, o_ref):
    """Fused pooler (dense + tanh on [CLS]) and classifier Linear(H, 3)."""
    pooled = jnp.dot(x_ref[...], wp_ref[...], preferred_element_type=jnp.float32)
    pooled = jnp.tanh(pooled + bp_ref[...])
    logits = jnp.dot(pooled.astype(wc_ref.dtype), wc_ref[...],
                     preferred_element_type=jnp.float32)
    o_ref[...] = logits + bc_ref[...]


def pooler_classifier(cls, wp, bp, wc, bc):
    B, H = cls.shape
    L = wc.shape[1]
    return pl.pallas_call(
        _pooler_cls_kernel,
        out_shape=jax.ShapeDtypeStruct((B, L), jnp.float32),
        grid=(1,),
        in_specs=[
            pl.BlockSpec((B, H), lambda i: (0, 0)),
            pl.BlockSpec((H, H), lambda i: (0, 0)),
            pl.BlockSpec((1, H), lambda i: (0, 0)),
            pl.BlockSpec((H, L), lambda i: (0, 0)),
            pl.BlockSpec((1, L), lambda i: (0, 0)),
        ],
        out_specs=pl.BlockSpec((B, L), lambda i: (0, 0)),
        compiler_params=pltpu.CompilerParams(vmem_limit_bytes=_VMEM_LIMIT),
    )(cls, wp, bp.reshape(1, H), wc, bc.reshape(1, L))


# ------------------------------ model (glue) -------------------------------

class Config:
    vocab_size = 64
    type_vocab_size = 2
    max_position = 16
    hidden = 32          # BERT-base would be 768
    heads = 4            # BERT-base would be 12
    intermediate = 64    # BERT-base would be 3072
    layers = 2           # BERT-base would be 12
    num_labels = 3       # nn.Linear(768, 3)


def init_params(key, cfg):
    def nrm(k, shape, scale=0.02):
        return scale * jax.random.normal(k, shape, dtype=jnp.float32)

    bf = jnp.bfloat16
    keys = iter(jax.random.split(key, 64))
    H, I = cfg.hidden, cfg.intermediate
    params = {
        "word_emb": nrm(next(keys), (cfg.vocab_size, H)),
        "pos_emb": nrm(next(keys), (cfg.max_position, H)),
        "type_emb": nrm(next(keys), (cfg.type_vocab_size, H)),
        "emb_ln_g": jnp.ones((H,), jnp.float32),
        "emb_ln_b": jnp.zeros((H,), jnp.float32),
        "layers": [],
        "pooler_w": nrm(next(keys), (H, H)).astype(bf),
        "pooler_b": jnp.zeros((H,), jnp.float32),
        "cls_w": nrm(next(keys), (H, cfg.num_labels)).astype(bf),
        "cls_b": jnp.zeros((cfg.num_labels,), jnp.float32),
    }
    for _ in range(cfg.layers):
        params["layers"].append({
            # fused QKV projection weight, column order [Wq | Wk | Wv], stored bf16
            "w_qkv": jnp.concatenate(
                [nrm(next(keys), (H, H)), nrm(next(keys), (H, H)),
                 nrm(next(keys), (H, H))], axis=1).astype(bf),
            "b_qkv": jnp.zeros((3 * H,), jnp.float32),
            "wo": nrm(next(keys), (H, H)).astype(bf), "bo": jnp.zeros((H,), jnp.float32),
            "ln1_g": jnp.ones((H,), jnp.float32), "ln1_b": jnp.zeros((H,), jnp.float32),
            "wi": nrm(next(keys), (H, I)).astype(bf), "bi": jnp.zeros((I,), jnp.float32),
            "wf": nrm(next(keys), (I, H)).astype(bf), "bf": jnp.zeros((H,), jnp.float32),
            "ln2_g": jnp.ones((H,), jnp.float32), "ln2_b": jnp.zeros((H,), jnp.float32),
        })
    return params


def bert_base_cased_forward(params, ids, mask, cfg):
    """Mirrors BERTBaseCased.forward(ids, mask): BertModel -> dropout -> Linear(H, 3)."""
    B, S = ids.shape
    H, nH = cfg.hidden, cfg.heads
    Dh = H // nH

    # --- embeddings (gathers stay in XLA; LN is a Pallas kernel, outputs bf16) ---
    pos_ids = jnp.arange(S)
    type_ids = jnp.zeros((B, S), jnp.int32)
    emb = (params["word_emb"][ids]
           + params["pos_emb"][pos_ids][None, :, :]
           + params["type_emb"][type_ids])
    h = layernorm(emb.reshape(B * S, H), params["emb_ln_g"], params["emb_ln_b"])

    # extended attention mask: 0 where attended, large negative where masked. (B,1,S)
    mask_bias = ((1.0 - mask.astype(jnp.float32)) * -1e9)[:, None, :]

    for lyr in params["layers"]:
        qkv = dense_bias_act(h, lyr["w_qkv"], lyr["b_qkv"])            # (B*S, 3H) bf16
        ctx = attention(qkv.reshape(B, S, 3 * H), mask_bias, nH, Dh)   # (B, S, H) bf16
        h = dense_residual_ln(ctx.reshape(B * S, H), lyr["wo"], lyr["bo"],
                              h, lyr["ln1_g"], lyr["ln1_b"])
        inter = dense_bias_act(h, lyr["wi"], lyr["bi"], act="gelu")    # (B*S, I) bf16
        h = dense_residual_ln(inter, lyr["wf"], lyr["bf"],
                              h, lyr["ln2_g"], lyr["ln2_b"])

    # --- pooler (dense + tanh on [CLS]) fused with the classifier head ---
    cls = h.reshape(B, S, H)[:, 0, :]
    # TODO(synk): nn.Dropout(0.3) is identity at inference; training-mode dropout not implemented.
    logits = pooler_classifier(cls, params["pooler_w"], params["pooler_b"],
                               params["cls_w"], params["cls_b"])       # (B, 3)
    return logits


if __name__ == "__main__":
    cfg = Config()
    key = jax.random.PRNGKey(0)
    pkey, ikey = jax.random.split(key)
    params = init_params(pkey, cfg)

    B, S = 2, 8
    ids = jax.random.randint(ikey, (B, S), 0, cfg.vocab_size, dtype=jnp.int32)
    mask = jnp.ones((B, S), jnp.int32).at[1, 6:].set(0)   # pad tail of example 1

    fwd = jax.jit(functools.partial(bert_base_cased_forward, cfg=cfg))
    logits = fwd(params, ids, mask)
    logits = jax.block_until_ready(logits)
    assert logits.shape == (B, cfg.num_labels)
    assert bool(jnp.all(jnp.isfinite(logits)))
    print("KERNEL_OK")
</pallas_src>

<mosaic_0001>
module attributes {stable_mosaic.version = 11 : i64} {
  func.func @_ln_kernel(%arg0: i32, %arg1: memref<16x32xf32, #tpu.memory_space<vmem>>, %arg2: memref<1x32xf32, #tpu.memory_space<vmem>>, %arg3: memref<1x32xf32, #tpu.memory_space<vmem>>, %arg4: memref<16x32xbf16, #tpu.memory_space<vmem>>) attributes {dimension_semantics = [#tpu.dimension_semantics<parallel>], iteration_bounds = array<i64: 1>, scalar_prefetch = 0 : i64, scratch_operands = 0 : i64, tpu.core_type = #tpu.core_type<tc>, window_params = [{transform_indices = @transform_0, window_bounds = array<i64: 16, 32>}, {pipeline_mode = #tpu.pipeline_mode<synchronous>, transform_indices = @transform_1, window_bounds = array<i64: 1, 32>}, {pipeline_mode = #tpu.pipeline_mode<synchronous>, transform_indices = @transform_2, window_bounds = array<i64: 1, 32>}, {transform_indices = @transform_3, window_bounds = array<i64: 16, 32>}]} {
    %c0 = arith.constant 0 : index
    %c0_0 = arith.constant 0 : index
    %0 = vector.load %arg1[%c0, %c0_0] : memref<16x32xf32, #tpu.memory_space<vmem>>, vector<16x32xf32>
    %cst = arith.constant dense<0.000000e+00> : vector<16xf32>
    %1 = vector.multi_reduction <add>, %0, %cst [1] : vector<16x32xf32> to vector<16xf32>
    %2 = vector.shape_cast %1 : vector<16xf32> to vector<16x1xf32>
    %cst_1 = arith.constant 3.200000e+01 : f32
    %3 = vector.broadcast %cst_1 : f32 to vector<16x1xf32>
    %4 = arith.divf %2, %3 : vector<16x1xf32>
    %5 = vector.broadcast %4 : vector<16x1xf32> to vector<16x32xf32>
    %6 = arith.subf %0, %5 : vector<16x32xf32>
    %7 = arith.mulf %6, %6 : vector<16x32xf32>
    %cst_2 = arith.constant dense<0.000000e+00> : vector<16xf32>
    %8 = vector.multi_reduction <add>, %7, %cst_2 [1] : vector<16x32xf32> to vector<16xf32>
    %9 = vector.shape_cast %8 : vector<16xf32> to vector<16x1xf32>
    %cst_3 = arith.constant 3.200000e+01 : f32
    %10 = vector.broadcast %cst_3 : f32 to vector<16x1xf32>
    %11 = arith.divf %9, %10 : vector<16x1xf32>
    %cst_4 = arith.constant 9.99999996E-13 : f32
    %12 = vector.broadcast %cst_4 : f32 to vector<16x1xf32>
    %13 = arith.addf %11, %12 : vector<16x1xf32>
    %14 = math.rsqrt %13 : vector<16x1xf32>
    %15 = vector.broadcast %14 : vector<16x1xf32> to vector<16x32xf32>
    %16 = arith.mulf %6, %15 : vector<16x32xf32>
    %c0_5 = arith.constant 0 : index
    %c0_6 = arith.constant 0 : index
    %17 = vector.load %arg2[%c0_5, %c0_6] : memref<1x32xf32, #tpu.memory_space<vmem>>, vector<1x32xf32>
    %18 = vector.broadcast %17 : vector<1x32xf32> to vector<16x32xf32>
    %19 = arith.mulf %16, %18 : vector<16x32xf32>
    %c0_7 = arith.constant 0 : index
    %c0_8 = arith.constant 0 : index
    %20 = vector.load %arg3[%c0_7, %c0_8] : memref<1x32xf32, #tpu.memory_space<vmem>>, vector<1x32xf32>
    %21 = vector.broadcast %20 : vector<1x32xf32> to vector<16x32xf32>
    %22 = arith.addf %19, %21 : vector<16x32xf32>
    %23 = arith.truncf %22 : vector<16x32xf32> to vector<16x32xbf16>
    %c0_9 = arith.constant 0 : index
    %c0_10 = arith.constant 0 : index
    %24 = vector.load %arg4[%c0_9, %c0_10] : memref<16x32xbf16, #tpu.memory_space<vmem>>, vector<16x32xbf16>
    tpu.vector_store %arg4[%c0_9, %c0_10], %23 {strides = array<i32>} : memref<16x32xbf16, #tpu.memory_space<vmem>>, vector<16x32xbf16>,
    return
  }
  func.func @transform_0(%arg0: i32) -> (i32, i32) {
    %c0_i32 = arith.constant 0 : i32
    %c0_i32_0 = arith.constant 0 : i32
    return %arg0, %c0_i32 : i32, i32
  }
  func.func @transform_1(%arg0: i32) -> (i32, i32) {
    %c0_i32 = arith.constant 0 : i32
    %c0_i32_0 = arith.constant 0 : i32
    %c0_i32_1 = arith.constant 0 : i32
    return %c0_i32, %c0_i32_0 : i32, i32
  }
  func.func @transform_2(%arg0: i32) -> (i32, i32) {
    %c0_i32 = arith.constant 0 : i32
    %c0_i32_0 = arith.constant 0 : i32
    %c0_i32_1 = arith.constant 0 : i32
    return %c0_i32, %c0_i32_0 : i32, i32
  }
  func.func @transform_3(%arg0: i32) -> (i32, i32) {
    %c0_i32 = arith.constant 0 : i32
    %c0_i32_0 = arith.constant 0 : i32
    return %arg0, %c0_i32 : i32, i32
  }
}

module attributes {stable_mosaic.version = 11 : i64} {
  func.func @_dense_kernel(%arg0: i32, %arg1: i32, %arg2: i32, %arg3: memref<16x32xbf16, #tpu.memory_space<vmem>>, %arg4: memref<32x96xbf16, #tpu.memory_space<vmem>>, %arg5: memref<1x96xf32, #tpu.memory_space<vmem>>, %arg6: memref<16x96xbf16, #tpu.memory_space<vmem>>, %arg7: memref<16x96xf32, #tpu.memory_space<vmem>>) attributes {dimension_semantics = [#tpu.dimension_semantics<parallel>, #tpu.dimension_semantics<parallel>, #tpu.dimension_semantics<arbitrary>], iteration_bounds = array<i64: 1, 1, 1>, scalar_prefetch = 0 : i64, scratch_operands = 1 : i64, tpu.core_type = #tpu.core_type<tc>, window_params = [{transform_indices = @transform_0, window_bounds = array<i64: 16, 32>}, {transform_indices = @transform_1, window_bounds = array<i64: 32, 96>}, {transform_indices = @transform_2, window_bounds = array<i64: 1, 96>}, {transform_indices = @transform_3, window_bounds = array<i64: 16, 96>}]} {
    %c0_i32 = arith.constant 0 : i32
    %0 = arith.cmpi eq, %arg2, %c0_i32 : i32
    %1 = arith.extui %0 : i1 to i32
    %c0_i32_0 = arith.constant 0 : i32
    %2 = arith.cmpi ne, %1, %c0_i32_0 : i32
    scf.if %2 {
      %cst_10 = arith.constant 0.000000e+00 : f32
      %12 = vector.broadcast %cst_10 : f32 to vector<16x96xf32>
      %c0_11 = arith.constant 0 : index
      %c0_12 = arith.constant 0 : index
      %13 = vector.load %arg7[%c0_11, %c0_12] : memref<16x96xf32, #tpu.memory_space<vmem>>, vector<16x96xf32>
      tpu.vector_store %arg7[%c0_11, %c0_12], %12 {strides = array<i32>} : memref<16x96xf32, #tpu.memory_space<vmem>>, vector<16x96xf32>,
    } else {
    }
    %c0 = arith.constant 0 : index
    %c0_1 = arith.constant 0 : index
    %3 = vector.load %arg7[%c0, %c0_1] : memref<16x96xf32, #tpu.memory_space<vmem>>, vector<16x96xf32>
    %c0_2 = arith.constant 0 : index
    %c0_3 = arith.constant 0 : index
    %4 = vector.load %arg3[%c0_2, %c0_3] : memref<16x32xbf16, #tpu.memory_space<vmem>>, vector<16x32xbf16>
    %c0_4 = arith.constant 0 : index
    %c0_5 = arith.constant 0 : index
    %5 = vector.load %arg4[%c0_4, %c0_5] : memref<32x96xbf16, #tpu.memory_space<vmem>>, vector<32x96xbf16>
    %cst = arith.constant dense<0.000000e+00> : vector<16x96xf32>
    %6 = tpu.matmul %4, %5, %cst {dimension_numbers = #tpu.dot_dimension_numbers<[1], [0], [0], [1], [0, 0, 1, 1], [], []>} : vector<16x32xbf16>, vector<32x96xbf16>, vector<16x96xf32> -> vector<16x96xf32>
    %7 = arith.addf %3, %6 : vector<16x96xf32>
    %c0_6 = arith.constant 0 : index
    %c0_7 = arith.constant 0 : index
    %8 = vector.load %arg7[%c0_6, %c0_7] : memref<16x96xf32, #tpu.memory_space<vmem>>, vector<16x96xf32>
    tpu.vector_store %arg7[%c0_6, %c0_7], %7 {strides = array<i32>} : memref<16x96xf32, #tpu.memory_space<vmem>>, vector<16x96xf32>,
    %c0_i32_8 = arith.constant 0 : i32
    %9 = arith.cmpi eq, %arg2, %c0_i32_8 : i32
    %10 = arith.extui %9 : i1 to i32
    %c0_i32_9 = arith.constant 0 : i32
    %11 = arith.cmpi ne, %10, %c0_i32_9 : i32
    scf.if %11 {
      %c0_10 = arith.constant 0 : index
      %c0_11 = arith.constant 0 : index
      %12 = vector.load %arg7[%c0_10, %c0_11] : memref<16x96xf32, #tpu.memory_space<vmem>>, vector<16x96xf32>
      %c0_12 = arith.constant 0 : index
      %c0_13 = arith.constant 0 : index
      %13 = vector.load %arg5[%c0_12, %c0_13] : memref<1x96xf32, #tpu.memory_space<vmem>>, vector<1x96xf32>
      %14 = vector.broadcast %13 : vector<1x96xf32> to vector<16x96xf32>
      %15 = arith.addf %12, %14 : vector<16x96xf32>
      %16 = arith.truncf %15 : vector<16x96xf32> to vector<16x96xbf16>
      %c0_14 = arith.constant 0 : index
      %c0_15 = arith.constant 0 : index
      %17 = vector.load %arg6[%c0_14, %c0_15] : memref<16x96xbf16, #tpu.memory_space<vmem>>, vector<16x96xbf16>
      tpu.vector_store %arg6[%c0_14, %c0_15], %16 {strides = array<i32>} : memref<16x96xbf16, #tpu.memory_space<vmem>>, vector<16x96xbf16>,
    } else {
    }
    return
  }
  func.func @transform_0(%arg0: i32, %arg1: i32, %arg2: i32) -> (i32, i32) {
    %c0_i32 = arith.constant 0 : i32
    return %arg0, %arg2 : i32, i32
  }
  func.func @transform_1(%arg0: i32, %arg1: i32, %arg2: i32) -> (i32, i32) {
    %c0_i32 = arith.constant 0 : i32
    return %arg2, %arg1 : i32, i32
  }
  func.func @transform_2(%arg0: i32, %arg1: i32, %arg2: i32) -> (i32, i32) {
    %c0_i32 = arith.constant 0 : i32
    %c0_i32_0 = arith.constant 0 : i32
    return %c0_i32, %arg1 : i32, i32
  }
  func.func @transform_3(%arg0: i32, %arg1: i32, %arg2: i32) -> (i32, i32) {
    %c0_i32 = arith.constant 0 : i32
    return %arg0, %arg1 : i32, i32
  }
}

module attributes {stable_mosaic.version = 11 : i64} {
  func.func @_dense_ln_kernel(%arg0: i32, %arg1: i32, %arg2: memref<16x32xbf16, #tpu.memory_space<vmem>>, %arg3: memref<32x32xbf16, #tpu.memory_space<vmem>>, %arg4: memref<1x32xf32, #tpu.memory_space<vmem>>, %arg5: memref<16x32xbf16, #tpu.memory_space<vmem>>, %arg6: memref<1x32xf32, #tpu.memory_space<vmem>>, %arg7: memref<1x32xf32, #tpu.memory_space<vmem>>, %arg8: memref<16x32xbf16, #tpu.memory_space<vmem>>, %arg9: memref<16x32xf32, #tpu.memory_space<vmem>>) attributes {dimension_semantics = [#tpu.dimension_semantics<parallel>, #tpu.dimension_semantics<arbitrary>], iteration_bounds = array<i64: 1, 1>, scalar_prefetch = 0 : i64, scratch_operands = 1 : i64, tpu.core_type = #tpu.core_type<tc>, window_params = [{transform_indices = @transform_0, window_bounds = array<i64: 16, 32>}, {transform_indices = @transform_1, window_bounds = array<i64: 32, 32>}, {pipeline_mode = #tpu.pipeline_mode<synchronous>, transform_indices = @transform_2, window_bounds = array<i64: 1, 32>}, {transform_indices = @transform_3, window_bounds = array<i64: 16, 32>}, {pipeline_mode = #tpu.pipeline_mode<synchronous>, transform_indices = @transform_4, window_bounds = array<i64: 1, 32>}, {pipeline_mode = #tpu.pipeline_mode<synchronous>, transform_indices = @transform_5, window_bounds = array<i64: 1, 32>}, {transform_indices = @transform_6, window_bounds = array<i64: 16, 32>}]} {
    %c0_i32 = arith.constant 0 : i32
    %0 = arith.cmpi eq, %arg1, %c0_i32 : i32
    %1 = arith.extui %0 : i1 to i32
    %c0_i32_0 = arith.constant 0 : i32
    %2 = arith.cmpi ne, %1, %c0_i32_0 : i32
    scf.if %2 {
      %cst_10 = arith.constant 0.000000e+00 : f32
      %12 = vector.broadcast %cst_10 : f32 to vector<16x32xf32>
      %c0_11 = arith.constant 0 : index
      %c0_12 = arith.constant 0 : index
      %13 = vector.load %arg9[%c0_11, %c0_12] : memref<16x32xf32, #tpu.memory_space<vmem>>, vector<16x32xf32>
      tpu.vector_store %arg9[%c0_11, %c0_12], %12 {strides = array<i32>} : memref<16x32xf32, #tpu.memory_space<vmem>>, vector<16x32xf32>,
    } else {
    }
    %c0 = arith.constant 0 : index
    %c0_1 = arith.constant 0 : index
    %3 = vector.load %arg9[%c0, %c0_1] : memref<16x32xf32, #tpu.memory_space<vmem>>, vector<16x32xf32>
    %c0_2 = arith.constant 0 : index
    %c0_3 = arith.constant 0 : index
    %4 = vector.load %arg2[%c0_2, %c0_3] : memref<16x32xbf16, #tpu.memory_space<vmem>>, vector<16x32xbf16>
    %c0_4 = arith.constant 0 : index
    %c0_5 = arith.constant 0 : index
    %5 = vector.load %arg3[%c0_4, %c0_5] : memref<32x32xbf16, #tpu.memory_space<vmem>>, vector<32x32xbf16>
    %cst = arith.constant dense<0.000000e+00> : vector<16x32xf32>
    %6 = tpu.matmul %4, %5, %cst {dimension_numbers = #tpu.dot_dimension_numbers<[1], [0], [0], [1], [0, 0, 1, 1], [], []>} : vector<16x32xbf16>, vector<32x32xbf16>, vector<16x32xf32> -> vector<16x32xf32>
    %7 = arith.addf %3, %6 : vector<16x32xf32>
    %c0_6 = arith.constant 0 : index
    %c0_7 = arith.constant 0 : index
    %8 = vector.load %arg9[%c0_6, %c0_7] : memref<16x32xf32, #tpu.memory_space<vmem>>, vector<16x32xf32>
    tpu.vector_store %arg9[%c0_6, %c0_7], %7 {strides = array<i32>} : memref<16x32xf32, #tpu.memory_space<vmem>>, vector<16x32xf32>,
    %c0_i32_8 = arith.constant 0 : i32
    %9 = arith.cmpi eq, %arg1, %c0_i32_8 : i32
    %10 = arith.extui %9 : i1 to i32
    %c0_i32_9 = arith.constant 0 : i32
    %11 = arith.cmpi ne, %10, %c0_i32_9 : i32
    scf.if %11 {
      %c0_10 = arith.constant 0 : index
      %c0_11 = arith.constant 0 : index
      %12 = vector.load %arg9[%c0_10, %c0_11] : memref<16x32xf32, #tpu.memory_space<vmem>>, vector<16x32xf32>
      %c0_12 = arith.constant 0 : index
      %c0_13 = arith.constant 0 : index
      %13 = vector.load %arg4[%c0_12, %c0_13] : memref<1x32xf32, #tpu.memory_space<vmem>>, vector<1x32xf32>
      %14 = vector.broadcast %13 : vector<1x32xf32> to vector<16x32xf32>
      %15 = arith.addf %12, %14 : vector<16x32xf32>
      %c0_14 = arith.constant 0 : index
      %c0_15 = arith.constant 0 : index
      %16 = vector.load %arg5[%c0_14, %c0_15] : memref<16x32xbf16, #tpu.memory_space<vmem>>, vector<16x32xbf16>
      %17 = arith.extf %16 : vector<16x32xbf16> to vector<16x32xf32>
      %18 = arith.addf %15, %17 : vector<16x32xf32>
      %cst_16 = arith.constant dense<0.000000e+00> : vector<16xf32>
      %19 = vector.multi_reduction <add>, %18, %cst_16 [1] : vector<16x32xf32> to vector<16xf32>
      %20 = vector.shape_cast %19 : vector<16xf32> to vector<16x1xf32>
      %cst_17 = arith.constant 3.200000e+01 : f32
      %21 = vector.broadcast %cst_17 : f32 to vector<16x1xf32>
      %22 = arith.divf %20, %21 : vector<16x1xf32>
      %23 = vector.broadcast %22 : vector<16x1xf32> to vector<16x32xf32>
      %24 = arith.subf %18, %23 : vector<16x32xf32>
      %25 = arith.mulf %24, %24 : vector<16x32xf32>
      %cst_18 = arith.constant dense<0.000000e+00> : vector<16xf32>
      %26 = vector.multi_reduction <add>, %25, %cst_18 [1] : vector<16x32xf32> to vector<16xf32>
      %27 = vector.shape_cast %26 : vector<16xf32> to vector<16x1xf32>
      %cst_19 = arith.constant 3.200000e+01 : f32
      %28 = vector.broadcast %cst_19 : f32 to vector<16x1xf32>
      %29 = arith.divf %27, %28 : vector<16x1xf32>
      %cst_20 = arith.constant 9.99999996E-13 : f32
      %30 = vector.broadcast %cst_20 : f32 to vector<16x1xf32>
      %31 = arith.addf %29, %30 : vector<16x1xf32>
      %32 = math.rsqrt %31 : vector<16x1xf32>
      %33 = vector.broadcast %32 : vector<16x1xf32> to vector<16x32xf32>
      %34 = arith.mulf %24, %33 : vector<16x32xf32>
      %c0_21 = arith.constant 0 : index
      %c0_22 = arith.constant 0 : index
      %35 = vector.load %arg6[%c0_21, %c0_22] : memref<1x32xf32, #tpu.memory_space<vmem>>, vector<1x32xf32>
      %36 = vector.broadcast %35 : vector<1x32xf32> to vector<16x32xf32>
      %37 = arith.mulf %34, %36 : vector<16x32xf32>
      %c0_23 = arith.constant 0 : index
      %c0_24 = arith.constant 0 : index
      %38 = vector.load %arg7[%c0_23, %c0_24] : memref<1x32xf32, #tpu.memory_space<vmem>>, vector<1x32xf32>
      %39 = vector.broadcast %38 : vector<1x32xf32> to vector<16x32xf32>
      %40 = arith.addf %37, %39 : vector<16x32xf32>
      %41 = arith.truncf %40 : vector<16x32xf32> to vector<16x32xbf16>
      %c0_25 = arith.constant 0 : index
      %c0_26 = arith.constant 0 : index
      %42 = vector.load %arg8[%c0_25, %c0_26] : memref<16x32xbf16, #tpu.memory_space<vmem>>, vector<16x32xbf16>
      tpu.vector_store %arg8[%c0_25, %c0_26], %41 {strides = array<i32>} : memref<16x32xbf16, #tpu.memory_space<vmem>>, vector<16x32xbf16>,
    } else {
    }
    return
  }
  func.func @transform_0(%arg0: i32, %arg1: i32) -> (i32, i32) {
    %c0_i32 = arith.constant 0 : i32
    return %arg0, %arg1 : i32, i32
  }
  func.func @transform_1(%arg0: i32, %arg1: i32) -> (i32, i32) {
    %c0_i32 = arith.constant 0 : i32
    %c0_i32_0 = arith.constant 0 : i32
    return %arg1, %c0_i32 : i32, i32
  }
  func.func @transform_2(%arg0: i32, %arg1: i32) -> (i32, i32) {
    %c0_i32 = arith.constant 0 : i32
    %c0_i32_0 = arith.constant 0 : i32
    %c0_i32_1 = arith.constant 0 : i32
    return %c0_i32, %c0_i32_0 : i32, i32
  }
  func.func @transform_3(%arg0: i32, %arg1: i32) -> (i32, i32) {
    %c0_i32 = arith.constant 0 : i32
    %c0_i32_0 = arith.constant 0 : i32
    return %arg0, %c0_i32 : i32, i32
  }
  func.func @transform_4(%arg0: i32, %arg1: i32) -> (i32, i32) {
    %c0_i32 = arith.constant 0 : i32
    %c0_i32_0 = arith.constant 0 : i32
    %c0_i32_1 = arith.constant 0 : i32
    return %c0_i32, %c0_i32_0 : i32, i32
  }
  func.func @transform_5(%arg0: i32, %arg1: i32) -> (i32, i32) {
    %c0_i32 = arith.constant 0 : i32
    %c0_i32_0 = arith.constant 0 : i32
    %c0_i32_1 = arith.constant 0 : i32
    return %c0_i32, %c0_i32_0 : i32, i32
  }
  func.func @transform_6(%arg0: i32, %arg1: i32) -> (i32, i32) {
    %c0_i32 = arith.constant 0 : i32
    %c0_i32_0 = arith.constant 0 : i32
    return %arg0, %c0_i32 : i32, i32
  }
}

module attributes {stable_mosaic.version = 11 : i64} {
  func.func @_attention_kernel(%arg0: i32, %arg1: memref<1x8x96xbf16, #tpu.memory_space<vmem>>, %arg2: memref<1x1x8xf32, #tpu.memory_space<vmem>>, %arg3: memref<1x8x32xbf16, #tpu.memory_space<vmem>>) attributes {dimension_semantics = [#tpu.dimension_semantics<parallel>], iteration_bounds = array<i64: 2>, scalar_prefetch = 0 : i64, scratch_operands = 0 : i64, tpu.core_type = #tpu.core_type<tc>, window_params = [{transform_indices = @transform_0, window_bounds = array<i64: 1, 8, 96>}, {transform_indices = @transform_1, window_bounds = array<i64: 1, 1, 8>}, {transform_indices = @transform_2, window_bounds = array<i64: 1, 8, 32>}]} {
    %c0 = arith.constant 0 : index
    %c0_0 = arith.constant 0 : index
    %c0_1 = arith.constant 0 : index
    %0 = vector.load %arg1[%c0, %c0_0, %c0_1] : memref<1x8x96xbf16, #tpu.memory_space<vmem>>, vector<1x8x96xbf16>
    %1 = vector.shape_cast %0 : vector<1x8x96xbf16> to vector<8x96xbf16>
    %c0_2 = arith.constant 0 : index
    %c0_3 = arith.constant 0 : index
    %c0_4 = arith.constant 0 : index
    %2 = vector.load %arg2[%c0_2, %c0_3, %c0_4] : memref<1x1x8xf32, #tpu.memory_space<vmem>>, vector<1x1x8xf32>
    %3 = vector.shape_cast %2 : vector<1x1x8xf32> to vector<1x8xf32>
    %4 = vector.extract_strided_slice %1 {offsets = [0, 0], sizes = [8, 8], strides = [1, 1]} : vector<8x96xbf16> to vector<8x8xbf16>
    %5 = vector.extract_strided_slice %1 {offsets = [0, 32], sizes = [8, 8], strides = [1, 1]} : vector<8x96xbf16> to vector<8x8xbf16>
    %6 = vector.extract_strided_slice %1 {offsets = [0, 64], sizes = [8, 8], strides = [1, 1]} : vector<8x96xbf16> to vector<8x8xbf16>
    %cst = arith.constant dense<0.000000e+00> : vector<8x8xf32>
    %7 = tpu.matmul %4, %5, %cst {dimension_numbers = #tpu.dot_dimension_numbers<[1], [1], [0], [0], [0, 0, 1, 0], [], []>} : vector<8x8xbf16>, vector<8x8xbf16>, vector<8x8xf32> -> vector<8x8xf32>
    %cst_5 = arith.constant 0.353553385 : f32
    %8 = vector.broadcast %cst_5 : f32 to vector<8x8xf32>
    %9 = arith.mulf %7, %8 : vector<8x8xf32>
    %10 = vector.broadcast %3 : vector<1x8xf32> to vector<8x8xf32>
    %11 = arith.addf %9, %10 : vector<8x8xf32>
    %cst_6 = arith.constant dense<0xFF800000> : vector<8xf32>
    %12 = vector.multi_reduction <maximumf>, %11, %cst_6 [1] : vector<8x8xf32> to vector<8xf32>
    %13 = vector.shape_cast %12 : vector<8xf32> to vector<8x1xf32>
    %14 = vector.broadcast %13 : vector<8x1xf32> to vector<8x8xf32>
    %15 = arith.subf %11, %14 : vector<8x8xf32>
    %16 = math.exp %15 : vector<8x8xf32>
    %cst_7 = arith.constant dense<0.000000e+00> : vector<8xf32>
    %17 = vector.multi_reduction <add>, %16, %cst_7 [1] : vector<8x8xf32> to vector<8xf32>
    %18 = vector.shape_cast %17 : vector<8xf32> to vector<8x1xf32>
    %19 = tpu.reciprocal %18 {approx = true} : vector<8x1xf32> -> vector<8x1xf32>
    %20 = vector.broadcast %19 : vector<8x1xf32> to vector<8x8xf32>
    %21 = arith.mulf %16, %20 : vector<8x8xf32>
    %22 = arith.truncf %21 : vector<8x8xf32> to vector<8x8xbf16>
    %cst_8 = arith.constant dense<0.000000e+00> : vector<8x8xf32>
    %23 = tpu.matmul %22, %6, %cst_8 {dimension_numbers = #tpu.dot_dimension_numbers<[1], [0], [0], [1], [0, 0, 1, 1], [], []>} : vector<8x8xbf16>, vector<8x8xbf16>, vector<8x8xf32> -> vector<8x8xf32>
    %24 = vector.extract_strided_slice %1 {offsets = [0, 8], sizes = [8, 8], strides = [1, 1]} : vector<8x96xbf16> to vector<8x8xbf16>
    %25 = vector.extract_strided_slice %1 {offsets = [0, 40], sizes = [8, 8], strides = [1, 1]} : vector<8x96xbf16> to vector<8x8xbf16>
    %26 = vector.extract_strided_slice %1 {offsets = [0, 72], sizes = [8, 8], strides = [1, 1]} : vector<8x96xbf16> to vector<8x8xbf16>
    %cst_9 = arith.constant dense<0.000000e+00> : vector<8x8xf32>
    %27 = tpu.matmul %24, %25, %cst_9 {dimension_numbers = #tpu.dot_dimension_numbers<[1], [1], [0], [0], [0, 0, 1, 0], [], []>} : vector<8x8xbf16>, vector<8x8xbf16>, vector<8x8xf32> -> vector<8x8xf32>
    %cst_10 = arith.constant 0.353553385 : f32
    %28 = vector.broadcast %cst_10 : f32 to vector<8x8xf32>
    %29 = arith.mulf %27, %28 : vector<8x8xf32>
    %30 = vector.broadcast %3 : vector<1x8xf32> to vector<8x8xf32>
    %31 = arith.addf %29, %30 : vector<8x8xf32>
    %cst_11 = arith.constant dense<0xFF800000> : vector<8xf32>
    %32 = vector.multi_reduction <maximumf>, %31, %cst_11 [1] : vector<8x8xf32> to vector<8xf32>
    %33 = vector.shape_cast %32 : vector<8xf32> to vector<8x1xf32>
    %34 = vector.broadcast %33 : vector<8x1xf32> to vector<8x8xf32>
    %35 = arith.subf %31, %34 : vector<8x8xf32>
    %36 = math.exp %35 : vector<8x8xf32>
    %cst_12 = arith.constant dense<0.000000e+00> : vector<8xf32>
    %37 = vector.multi_reduction <add>, %36, %cst_12 [1] : vector<8x8xf32> to vector<8xf32>
    %38 = vector.shape_cast %37 : vector<8xf32> to vector<8x1xf32>
    %39 = tpu.reciprocal %38 {approx = true} : vector<8x1xf32> -> vector<8x1xf32>
    %40 = vector.broadcast %39 : vector<8x1xf32> to vector<8x8xf32>
    %41 = arith.mulf %36, %40 : vector<8x8xf32>
    %42 = arith.truncf %41 : vector<8x8xf32> to vector<8x8xbf16>
    %cst_13 = arith.constant dense<0.000000e+00> : vector<8x8xf32>
    %43 = tpu.matmul %42, %26, %cst_13 {dimension_numbers = #tpu.dot_dimension_numbers<[1], [0], [0], [1], [0, 0, 1, 1], [], []>} : vector<8x8xbf16>, vector<8x8xbf16>, vector<8x8xf32> -> vector<8x8xf32>
    %44 = vector.extract_strided_slice %1 {offsets = [0, 16], sizes = [8, 8], strides = [1, 1]} : vector<8x96xbf16> to vector<8x8xbf16>
    %45 = vector.extract_strided_slice %1 {offsets = [0, 48], sizes = [8, 8], strides = [1, 1]} : vector<8x96xbf16> to vector<8x8xbf16>
    %46 = vector.extract_strided_slice %1 {offsets = [0, 80], sizes = [8, 8], strides = [1, 1]} : vector<8x96xbf16> to vector<8x8xbf16>
    %cst_14 = arith.constant dense<0.000000e+00> : vector<8x8xf32>
    %47 = tpu.matmul %44, %45, %cst_14 {dimension_numbers = #tpu.dot_dimension_numbers<[1], [1], [0], [0], [0, 0, 1, 0], [], []>} : vector<8x8xbf16>, vector<8x8xbf16>, vector<8x8xf32> -> vector<8x8xf32>
    %cst_15 = arith.constant 0.353553385 : f32
    %48 = vector.broadcast %cst_15 : f32 to vector<8x8xf32>
    %49 = arith.mulf %47, %48 : vector<8x8xf32>
    %50 = vector.broadcast %3 : vector<1x8xf32> to vector<8x8xf32>
    %51 = arith.addf %49, %50 : vector<8x8xf32>
    %cst_16 = arith.constant dense<0xFF800000> : vector<8xf32>
    %52 = vector.multi_reduction <maximumf>, %51, %cst_16 [1] : vector<8x8xf32> to vector<8xf32>
    %53 = vector.shape_cast %52 : vector<8xf32> to vector<8x1xf32>
    %54 = vector.broadcast %53 : vector<8x1xf32> to vector<8x8xf32>
    %55 = arith.subf %51, %54 : vector<8x8xf32>
    %56 = math.exp %55 : vector<8x8xf32>
    %cst_17 = arith.constant dense<0.000000e+00> : vector<8xf32>
    %57 = vector.multi_reduction <add>, %56, %cst_17 [1] : vector<8x8xf32> to vector<8xf32>
    %58 = vector.shape_cast %57 : vector<8xf32> to vector<8x1xf32>
    %59 = tpu.reciprocal %58 {approx = true} : vector<8x1xf32> -> vector<8x1xf32>
    %60 = vector.broadcast %59 : vector<8x1xf32> to vector<8x8xf32>
    %61 = arith.mulf %56, %60 : vector<8x8xf32>
    %62 = arith.truncf %61 : vector<8x8xf32> to vector<8x8xbf16>
    %cst_18 = arith.constant dense<0.000000e+00> : vector<8x8xf32>
    %63 = tpu.matmul %62, %46, %cst_18 {dimension_numbers = #tpu.dot_dimension_numbers<[1], [0], [0], [1], [0, 0, 1, 1], [], []>} : vector<8x8xbf16>, vector<8x8xbf16>, vector<8x8xf32> -> vector<8x8xf32>
    %64 = vector.extract_strided_slice %1 {offsets = [0, 24], sizes = [8, 8], strides = [1, 1]} : vector<8x96xbf16> to vector<8x8xbf16>
    %65 = vector.extract_strided_slice %1 {offsets = [0, 56], sizes = [8, 8], strides = [1, 1]} : vector<8x96xbf16> to vector<8x8xbf16>
    %66 = vector.extract_strided_slice %1 {offsets = [0, 88], sizes = [8, 8], strides = [1, 1]} : vector<8x96xbf16> to vector<8x8xbf16>
    %cst_19 = arith.constant dense<0.000000e+00> : vector<8x8xf32>
    %67 = tpu.matmul %64, %65, %cst_19 {dimension_numbers = #tpu.dot_dimension_numbers<[1], [1], [0], [0], [0, 0, 1, 0], [], []>} : vector<8x8xbf16>, vector<8x8xbf16>, vector<8x8xf32> -> vector<8x8xf32>
    %cst_20 = arith.constant 0.353553385 : f32
    %68 = vector.broadcast %cst_20 : f32 to vector<8x8xf32>
    %69 = arith.mulf %67, %68 : vector<8x8xf32>
    %70 = vector.broadcast %3 : vector<1x8xf32> to vector<8x8xf32>
    %71 = arith.addf %69, %70 : vector<8x8xf32>
    %cst_21 = arith.constant dense<0xFF800000> : vector<8xf32>
    %72 = vector.multi_reduction <maximumf>, %71, %cst_21 [1] : vector<8x8xf32> to vector<8xf32>
    %73 = vector.shape_cast %72 : vector<8xf32> to vector<8x1xf32>
    %74 = vector.broadcast %73 : vector<8x1xf32> to vector<8x8xf32>
    %75 = arith.subf %71, %74 : vector<8x8xf32>
    %76 = math.exp %75 : vector<8x8xf32>
    %cst_22 = arith.constant dense<0.000000e+00> : vector<8xf32>
    %77 = vector.multi_reduction <add>, %76, %cst_22 [1] : vector<8x8xf32> to vector<8xf32>
    %78 = vector.shape_cast %77 : vector<8xf32> to vector<8x1xf32>
    %79 = tpu.reciprocal %78 {approx = true} : vector<8x1xf32> -> vector<8x1xf32>
    %80 = vector.broadcast %79 : vector<8x1xf32> to vector<8x8xf32>
    %81 = arith.mulf %76, %80 : vector<8x8xf32>
    %82 = arith.truncf %81 : vector<8x8xf32> to vector<8x8xbf16>
    %cst_23 = arith.constant dense<0.000000e+00> : vector<8x8xf32>
    %83 = tpu.matmul %82, %66, %cst_23 {dimension_numbers = #tpu.dot_dimension_numbers<[1], [0], [0], [1], [0, 0, 1, 1], [], []>} : vector<8x8xbf16>, vector<8x8xbf16>, vector<8x8xf32> -> vector<8x8xf32>
    %84 = tpu.concatenate %23, %43, %63, %83 in 1 : vector<8x8xf32>, vector<8x8xf32>, vector<8x8xf32>, vector<8x8xf32> -> vector<8x32xf32>
    %85 = arith.truncf %84 : vector<8x32xf32> to vector<8x32xbf16>
    %c0_24 = arith.constant 0 : index
    %c0_25 = arith.constant 0 : index
    %c0_26 = arith.constant 0 : index
    %86 = vector.load %arg3[%c0_24, %c0_25, %c0_26] : memref<1x8x32xbf16, #tpu.memory_space<vmem>>, vector<1x8x32xbf16>
    %87 = vector.shape_cast %86 : vector<1x8x32xbf16> to vector<8x32xbf16>
    %88 = vector.shape_cast %85 : vector<8x32xbf16> to vector<1x8x32xbf16>
    tpu.vector_store %arg3[%c0_24, %c0_25, %c0_26], %88 {strides = array<i32>} : memref<1x8x32xbf16, #tpu.memory_space<vmem>>, vector<1x8x32xbf16>,
    return
  }
  func.func @transform_0(%arg0: i32) -> (i32, i32, i32) {
    %c0_i32 = arith.constant 0 : i32
    %c0_i32_0 = arith.constant 0 : i32
    %c0_i32_1 = arith.constant 0 : i32
    return %arg0, %c0_i32, %c0_i32_0 : i32, i32, i32
  }
  func.func @transform_1(%arg0: i32) -> (i32, i32, i32) {
    %c0_i32 = arith.constant 0 : i32
    %c0_i32_0 = arith.constant 0 : i32
    %c0_i32_1 = arith.constant 0 : i32
    return %arg0, %c0_i32, %c0_i32_0 : i32, i32, i32
  }
  func.func @transform_2(%arg0: i32) -> (i32, i32, i32) {
    %c0_i32 = arith.constant 0 : i32
    %c0_i32_0 = arith.constant 0 : i32
    %c0_i32_1 = arith.constant 0 : i32
    return %arg0, %c0_i32, %c0_i32_0 : i32, i32, i32
  }
}

module attributes {stable_mosaic.version = 11 : i64} {
  func.func @_dense_kernel(%arg0: i32, %arg1: i32, %arg2: i32, %arg3: memref<16x32xbf16, #tpu.memory_space<vmem>>, %arg4: memref<32x64xbf16, #tpu.memory_space<vmem>>, %arg5: memref<1x64xf32, #tpu.memory_space<vmem>>, %arg6: memref<16x64xbf16, #tpu.memory_space<vmem>>, %arg7: memref<16x64xf32, #tpu.memory_space<vmem>>) attributes {dimension_semantics = [#tpu.dimension_semantics<parallel>, #tpu.dimension_semantics<parallel>, #tpu.dimension_semantics<arbitrary>], iteration_bounds = array<i64: 1, 1, 1>, scalar_prefetch = 0 : i64, scratch_operands = 1 : i64, tpu.core_type = #tpu.core_type<tc>, window_params = [{transform_indices = @transform_0, window_bounds = array<i64: 16, 32>}, {transform_indices = @transform_1, window_bounds = array<i64: 32, 64>}, {transform_indices = @transform_2, window_bounds = array<i64: 1, 64>}, {transform_indices = @transform_3, window_bounds = array<i64: 16, 64>}]} {
    %c0_i32 = arith.constant 0 : i32
    %0 = arith.cmpi eq, %arg2, %c0_i32 : i32
    %1 = arith.extui %0 : i1 to i32
    %c0_i32_0 = arith.constant 0 : i32
    %2 = arith.cmpi ne, %1, %c0_i32_0 : i32
    scf.if %2 {
      %cst_10 = arith.constant 0.000000e+00 : f32
      %12 = vector.broadcast %cst_10 : f32 to vector<16x64xf32>
      %c0_11 = arith.constant 0 : index
      %c0_12 = arith.constant 0 : index
      %13 = vector.load %arg7[%c0_11, %c0_12] : memref<16x64xf32, #tpu.memory_space<vmem>>, vector<16x64xf32>
      tpu.vector_store %arg7[%c0_11, %c0_12], %12 {strides = array<i32>} : memref<16x64xf32, #tpu.memory_space<vmem>>, vector<16x64xf32>,
    } else {
    }
    %c0 = arith.constant 0 : index
    %c0_1 = arith.constant 0 : index
    %3 = vector.load %arg7[%c0, %c0_1] : memref<16x64xf32, #tpu.memory_space<vmem>>, vector<16x64xf32>
    %c0_2 = arith.constant 0 : index
    %c0_3 = arith.constant 0 : index
    %4 = vector.load %arg3[%c0_2, %c0_3] : memref<16x32xbf16, #tpu.memory_space<vmem>>, vector<16x32xbf16>
    %c0_4 = arith.constant 0 : index
    %c0_5 = arith.constant 0 : index
    %5 = vector.load %arg4[%c0_4, %c0_5] : memref<32x64xbf16, #tpu.memory_space<vmem>>, vector<32x64xbf16>
    %cst = arith.constant dense<0.000000e+00> : vector<16x64xf32>
    %6 = tpu.matmul %4, %5, %cst {dimension_numbers = #tpu.dot_dimension_numbers<[1], [0], [0], [1], [0, 0, 1, 1], [], []>} : vector<16x32xbf16>, vector<32x64xbf16>, vector<16x64xf32> -> vector<16x64xf32>
    %7 = arith.addf %3, %6 : vector<16x64xf32>
    %c0_6 = arith.constant 0 : index
    %c0_7 = arith.constant 0 : index
    %8 = vector.load %arg7[%c0_6, %c0_7] : memref<16x64xf32, #tpu.memory_space<vmem>>, vector<16x64xf32>
    tpu.vector_store %arg7[%c0_6, %c0_7], %7 {strides = array<i32>} : memref<16x64xf32, #tpu.memory_space<vmem>>, vector<16x64xf32>,
    %c0_i32_8 = arith.constant 0 : i32
    %9 = arith.cmpi eq, %arg2, %c0_i32_8 : i32
    %10 = arith.extui %9 : i1 to i32
    %c0_i32_9 = arith.constant 0 : i32
    %11 = arith.cmpi ne, %10, %c0_i32_9 : i32
    scf.if %11 {
      %c0_10 = arith.constant 0 : index
      %c0_11 = arith.constant 0 : index
      %12 = vector.load %arg7[%c0_10, %c0_11] : memref<16x64xf32, #tpu.memory_space<vmem>>, vector<16x64xf32>
      %c0_12 = arith.constant 0 : index
      %c0_13 = arith.constant 0 : index
      %13 = vector.load %arg5[%c0_12, %c0_13] : memref<1x64xf32, #tpu.memory_space<vmem>>, vector<1x64xf32>
      %14 = vector.broadcast %13 : vector<1x64xf32> to vector<16x64xf32>
      %15 = arith.addf %12, %14 : vector<16x64xf32>
      %cst_14 = arith.constant 5.000000e-01 : f32
      %16 = vector.broadcast %cst_14 : f32 to vector<16x64xf32>
      %17 = arith.mulf %16, %15 : vector<16x64xf32>
      %cst_15 = arith.constant 4.471500e-02 : f32
      %18 = vector.broadcast %cst_15 : f32 to vector<16x64xf32>
      %19 = arith.mulf %18, %15 : vector<16x64xf32>
      %20 = arith.mulf %19, %15 : vector<16x64xf32>
      %21 = arith.mulf %20, %15 : vector<16x64xf32>
      %22 = arith.addf %15, %21 : vector<16x64xf32>
      %cst_16 = arith.constant 0.797884583 : f32
      %23 = vector.broadcast %cst_16 : f32 to vector<16x64xf32>
      %24 = arith.mulf %23, %22 : vector<16x64xf32>
      %25 = math.tanh %24 : vector<16x64xf32>
      %cst_17 = arith.constant 1.000000e+00 : f32
      %26 = vector.broadcast %cst_17 : f32 to vector<16x64xf32>
      %27 = arith.addf %26, %25 : vector<16x64xf32>
      %28 = arith.mulf %17, %27 : vector<16x64xf32>
      %29 = arith.truncf %28 : vector<16x64xf32> to vector<16x64xbf16>
      %c0_18 = arith.constant 0 : index
      %c0_19 = arith.constant 0 : index
      %30 = vector.load %arg6[%c0_18, %c0_19] : memref<16x64xbf16, #tpu.memory_space<vmem>>, vector<16x64xbf16>
      tpu.vector_store %arg6[%c0_18, %c0_19], %29 {strides = array<i32>} : memref<16x64xbf16, #tpu.memory_space<vmem>>, vector<16x64xbf16>,
    } else {
    }
    return
  }
  func.func @transform_0(%arg0: i32, %arg1: i32, %arg2: i32) -> (i32, i32) {
    %c0_i32 = arith.constant 0 : i32
    return %arg0, %arg2 : i32, i32
  }
  func.func @transform_1(%arg0: i32, %arg1: i32, %arg2: i32) -> (i32, i32) {
    %c0_i32 = arith.constant 0 : i32
    return %arg2, %arg1 : i32, i32
  }
  func.func @transform_2(%arg0: i32, %arg1: i32, %arg2: i32) -> (i32, i32) {
    %c0_i32 = arith.constant 0 : i32
    %c0_i32_0 = arith.constant 0 : i32
    return %c0_i32, %arg1 : i32, i32
  }
  func.func @transform_3(%arg0: i32, %arg1: i32, %arg2: i32) -> (i32, i32) {
    %c0_i32 = arith.constant 0 : i32
    return %arg0, %arg1 : i32, i32
  }
}

module attributes {stable_mosaic.version = 11 : i64} {
  func.func @_dense_ln_kernel(%arg0: i32, %arg1: i32, %arg2: memref<16x64xbf16, #tpu.memory_space<vmem>>, %arg3: memref<64x32xbf16, #tpu.memory_space<vmem>>, %arg4: memref<1x32xf32, #tpu.memory_space<vmem>>, %arg5: memref<16x32xbf16, #tpu.memory_space<vmem>>, %arg6: memref<1x32xf32, #tpu.memory_space<vmem>>, %arg7: memref<1x32xf32, #tpu.memory_space<vmem>>, %arg8: memref<16x32xbf16, #tpu.memory_space<vmem>>, %arg9: memref<16x32xf32, #tpu.memory_space<vmem>>) attributes {dimension_semantics = [#tpu.dimension_semantics<parallel>, #tpu.dimension_semantics<arbitrary>], iteration_bounds = array<i64: 1, 1>, scalar_prefetch = 0 : i64, scratch_operands = 1 : i64, tpu.core_type = #tpu.core_type<tc>, window_params = [{transform_indices = @transform_0, window_bounds = array<i64: 16, 64>}, {transform_indices = @transform_1, window_bounds = array<i64: 64, 32>}, {pipeline_mode = #tpu.pipeline_mode<synchronous>, transform_indices = @transform_2, window_bounds = array<i64: 1, 32>}, {transform_indices = @transform_3, window_bounds = array<i64: 16, 32>}, {pipeline_mode = #tpu.pipeline_mode<synchronous>, transform_indices = @transform_4, window_bounds = array<i64: 1, 32>}, {pipeline_mode = #tpu.pipeline_mode<synchronous>, transform_indices = @transform_5, window_bounds = array<i64: 1, 32>}, {transform_indices = @transform_6, window_bounds = array<i64: 16, 32>}]} {
    %c0_i32 = arith.constant 0 : i32
    %0 = arith.cmpi eq, %arg1, %c0_i32 : i32
    %1 = arith.extui %0 : i1 to i32
    %c0_i32_0 = arith.constant 0 : i32
    %2 = arith.cmpi ne, %1, %c0_i32_0 : i32
    scf.if %2 {
      %cst_10 = arith.constant 0.000000e+00 : f32
      %12 = vector.broadcast %cst_10 : f32 to vector<16x32xf32>
      %c0_11 = arith.constant 0 : index
      %c0_12 = arith.constant 0 : index
      %13 = vector.load %arg9[%c0_11, %c0_12] : memref<16x32xf32, #tpu.memory_space<vmem>>, vector<16x32xf32>
      tpu.vector_store %arg9[%c0_11, %c0_12], %12 {strides = array<i32>} : memref<16x32xf32, #tpu.memory_space<vmem>>, vector<16x32xf32>,
    } else {
    }
    %c0 = arith.constant 0 : index
    %c0_1 = arith.constant 0 : index
    %3 = vector.load %arg9[%c0, %c0_1] : memref<16x32xf32, #tpu.memory_space<vmem>>, vector<16x32xf32>
    %c0_2 = arith.constant 0 : index
    %c0_3 = arith.constant 0 : index
    %4 = vector.load %arg2[%c0_2, %c0_3] : memref<16x64xbf16, #tpu.memory_space<vmem>>, vector<16x64xbf16>
    %c0_4 = arith.constant 0 : index
    %c0_5 = arith.constant 0 : index
    %5 = vector.load %arg3[%c0_4, %c0_5] : memref<64x32xbf16, #tpu.memory_space<vmem>>, vector<64x32xbf16>
    %cst = arith.constant dense<0.000000e+00> : vector<16x32xf32>
    %6 = tpu.matmul %4, %5, %cst {dimension_numbers = #tpu.dot_dimension_numbers<[1], [0], [0], [1], [0, 0, 1, 1], [], []>} : vector<16x64xbf16>, vector<64x32xbf16>, vector<16x32xf32> -> vector<16x32xf32>
    %7 = arith.addf %3, %6 : vector<16x32xf32>
    %c0_6 = arith.constant 0 : index
    %c0_7 = arith.constant 0 : index
    %8 = vector.load %arg9[%c0_6, %c0_7] : memref<16x32xf32, #tpu.memory_space<vmem>>, vector<16x32xf32>
    tpu.vector_store %arg9[%c0_6, %c0_7], %7 {strides = array<i32>} : memref<16x32xf32, #tpu.memory_space<vmem>>, vector<16x32xf32>,
    %c0_i32_8 = arith.constant 0 : i32
    %9 = arith.cmpi eq, %arg1, %c0_i32_8 : i32
    %10 = arith.extui %9 : i1 to i32
    %c0_i32_9 = arith.constant 0 : i32
    %11 = arith.cmpi ne, %10, %c0_i32_9 : i32
    scf.if %11 {
      %c0_10 = arith.constant 0 : index
      %c0_11 = arith.constant 0 : index
      %12 = vector.load %arg9[%c0_10, %c0_11] : memref<16x32xf32, #tpu.memory_space<vmem>>, vector<16x32xf32>
      %c0_12 = arith.constant 0 : index
      %c0_13 = arith.constant 0 : index
      %13 = vector.load %arg4[%c0_12, %c0_13] : memref<1x32xf32, #tpu.memory_space<vmem>>, vector<1x32xf32>
      %14 = vector.broadcast %13 : vector<1x32xf32> to vector<16x32xf32>
      %15 = arith.addf %12, %14 : vector<16x32xf32>
      %c0_14 = arith.constant 0 : index
      %c0_15 = arith.constant 0 : index
      %16 = vector.load %arg5[%c0_14, %c0_15] : memref<16x32xbf16, #tpu.memory_space<vmem>>, vector<16x32xbf16>
      %17 = arith.extf %16 : vector<16x32xbf16> to vector<16x32xf32>
      %18 = arith.addf %15, %17 : vector<16x32xf32>
      %cst_16 = arith.constant dense<0.000000e+00> : vector<16xf32>
      %19 = vector.multi_reduction <add>, %18, %cst_16 [1] : vector<16x32xf32> to vector<16xf32>
      %20 = vector.shape_cast %19 : vector<16xf32> to vector<16x1xf32>
      %cst_17 = arith.constant 3.200000e+01 : f32
      %21 = vector.broadcast %cst_17 : f32 to vector<16x1xf32>
      %22 = arith.divf %20, %21 : vector<16x1xf32>
      %23 = vector.broadcast %22 : vector<16x1xf32> to vector<16x32xf32>
      %24 = arith.subf %18, %23 : vector<16x32xf32>
      %25 = arith.mulf %24, %24 : vector<16x32xf32>
      %cst_18 = arith.constant dense<0.000000e+00> : vector<16xf32>
      %26 = vector.multi_reduction <add>, %25, %cst_18 [1] : vector<16x32xf32> to vector<16xf32>
      %27 = vector.shape_cast %26 : vector<16xf32> to vector<16x1xf32>
      %cst_19 = arith.constant 3.200000e+01 : f32
      %28 = vector.broadcast %cst_19 : f32 to vector<16x1xf32>
      %29 = arith.divf %27, %28 : vector<16x1xf32>
      %cst_20 = arith.constant 9.99999996E-13 : f32
      %30 = vector.broadcast %cst_20 : f32 to vector<16x1xf32>
      %31 = arith.addf %29, %30 : vector<16x1xf32>
      %32 = math.rsqrt %31 : vector<16x1xf32>
      %33 = vector.broadcast %32 : vector<16x1xf32> to vector<16x32xf32>
      %34 = arith.mulf %24, %33 : vector<16x32xf32>
      %c0_21 = arith.constant 0 : index
      %c0_22 = arith.constant 0 : index
      %35 = vector.load %arg6[%c0_21, %c0_22] : memref<1x32xf32, #tpu.memory_space<vmem>>, vector<1x32xf32>
      %36 = vector.broadcast %35 : vector<1x32xf32> to vector<16x32xf32>
      %37 = arith.mulf %34, %36 : vector<16x32xf32>
      %c0_23 = arith.constant 0 : index
      %c0_24 = arith.constant 0 : index
      %38 = vector.load %arg7[%c0_23, %c0_24] : memref<1x32xf32, #tpu.memory_space<vmem>>, vector<1x32xf32>
      %39 = vector.broadcast %38 : vector<1x32xf32> to vector<16x32xf32>
      %40 = arith.addf %37, %39 : vector<16x32xf32>
      %41 = arith.truncf %40 : vector<16x32xf32> to vector<16x32xbf16>
      %c0_25 = arith.constant 0 : index
      %c0_26 = arith.constant 0 : index
      %42 = vector.load %arg8[%c0_25, %c0_26] : memref<16x32xbf16, #tpu.memory_space<vmem>>, vector<16x32xbf16>
      tpu.vector_store %arg8[%c0_25, %c0_26], %41 {strides = array<i32>} : memref<16x32xbf16, #tpu.memory_space<vmem>>, vector<16x32xbf16>,
    } else {
    }
    return
  }
  func.func @transform_0(%arg0: i32, %arg1: i32) -> (i32, i32) {
    %c0_i32 = arith.constant 0 : i32
    return %arg0, %arg1 : i32, i32
  }
  func.func @transform_1(%arg0: i32, %arg1: i32) -> (i32, i32) {
    %c0_i32 = arith.constant 0 : i32
    %c0_i32_0 = arith.constant 0 : i32
    return %arg1, %c0_i32 : i32, i32
  }
  func.func @transform_2(%arg0: i32, %arg1: i32) -> (i32, i32) {
    %c0_i32 = arith.constant 0 : i32
    %c0_i32_0 = arith.constant 0 : i32
    %c0_i32_1 = arith.constant 0 : i32
    return %c0_i32, %c0_i32_0 : i32, i32
  }
  func.func @transform_3(%arg0: i32, %arg1: i32) -> (i32, i32) {
    %c0_i32 = arith.constant 0 : i32
    %c0_i32_0 = arith.constant 0 : i32
    return %arg0, %c0_i32 : i32, i32
  }
  func.func @transform_4(%arg0: i32, %arg1: i32) -> (i32, i32) {
    %c0_i32 = arith.constant 0 : i32
    %c0_i32_0 = arith.constant 0 : i32
    %c0_i32_1 = arith.constant 0 : i32
    return %c0_i32, %c0_i32_0 : i32, i32
  }
  func.func @transform_5(%arg0: i32, %arg1: i32) -> (i32, i32) {
    %c0_i32 = arith.constant 0 : i32
    %c0_i32_0 = arith.constant 0 : i32
    %c0_i32_1 = arith.constant 0 : i32
    return %c0_i32, %c0_i32_0 : i32, i32
  }
  func.func @transform_6(%arg0: i32, %arg1: i32) -> (i32, i32) {
    %c0_i32 = arith.constant 0 : i32
    %c0_i32_0 = arith.constant 0 : i32
    return %arg0, %c0_i32 : i32, i32
  }
}

module attributes {stable_mosaic.version = 11 : i64} {
  func.func @_pooler_cls_kernel(%arg0: i32, %arg1: memref<2x32xbf16, #tpu.memory_space<vmem>>, %arg2: memref<32x32xbf16, #tpu.memory_space<vmem>>, %arg3: memref<1x32xf32, #tpu.memory_space<vmem>>, %arg4: memref<32x3xbf16, #tpu.memory_space<vmem>>, %arg5: memref<1x3xf32, #tpu.memory_space<vmem>>, %arg6: memref<2x3xf32, #tpu.memory_space<vmem>>) attributes {dimension_semantics = [#tpu.dimension_semantics<arbitrary>], iteration_bounds = array<i64: 1>, scalar_prefetch = 0 : i64, scratch_operands = 0 : i64, tpu.core_type = #tpu.core_type<tc>, window_params = [{pipeline_mode = #tpu.pipeline_mode<synchronous>, transform_indices = @transform_0, window_bounds = array<i64: 2, 32>}, {pipeline_mode = #tpu.pipeline_mode<synchronous>, transform_indices = @transform_1, window_bounds = array<i64: 32, 32>}, {pipeline_mode = #tpu.pipeline_mode<synchronous>, transform_indices = @transform_2, window_bounds = array<i64: 1, 32>}, {pipeline_mode = #tpu.pipeline_mode<synchronous>, transform_indices = @transform_3, window_bounds = array<i64: 32, 3>}, {pipeline_mode = #tpu.pipeline_mode<synchronous>, transform_indices = @transform_4, window_bounds = array<i64: 1, 3>}, {pipeline_mode = #tpu.pipeline_mode<synchronous>, transform_indices = @transform_5, window_bounds = array<i64: 2, 3>}]} {
    %c0 = arith.constant 0 : index
    %c0_0 = arith.constant 0 : index
    %0 = vector.load %arg1[%c0, %c0_0] : memref<2x32xbf16, #tpu.memory_space<vmem>>, vector<2x32xbf16>
    %c0_1 = arith.constant 0 : index
    %c0_2 = arith.constant 0 : index
    %1 = vector.load %arg2[%c0_1, %c0_2] : memref<32x32xbf16, #tpu.memory_space<vmem>>, vector<32x32xbf16>
    %cst = arith.constant dense<0.000000e+00> : vector<2x32xf32>
    %2 = tpu.matmul %0, %1, %cst {dimension_numbers = #tpu.dot_dimension_numbers<[1], [0], [0], [1], [0, 0, 1, 1], [], []>} : vector<2x32xbf16>, vector<32x32xbf16>, vector<2x32xf32> -> vector<2x32xf32>
    %c0_3 = arith.constant 0 : index
    %c0_4 = arith.constant 0 : index
    %3 = vector.load %arg3[%c0_3, %c0_4] : memref<1x32xf32, #tpu.memory_space<vmem>>, vector<1x32xf32>
    %4 = vector.broadcast %3 : vector<1x32xf32> to vector<2x32xf32>
    %5 = arith.addf %2, %4 : vector<2x32xf32>
    %6 = math.tanh %5 : vector<2x32xf32>
    %7 = arith.truncf %6 : vector<2x32xf32> to vector<2x32xbf16>
    %c0_5 = arith.constant 0 : index
    %c0_6 = arith.constant 0 : index
    %8 = vector.load %arg4[%c0_5, %c0_6] : memref<32x3xbf16, #tpu.memory_space<vmem>>, vector<32x3xbf16>
    %cst_7 = arith.constant dense<0.000000e+00> : vector<2x3xf32>
    %9 = tpu.matmul %7, %8, %cst_7 {dimension_numbers = #tpu.dot_dimension_numbers<[1], [0], [0], [1], [0, 0, 1, 1], [], []>} : vector<2x32xbf16>, vector<32x3xbf16>, vector<2x3xf32> -> vector<2x3xf32>
    %c0_8 = arith.constant 0 : index
    %c0_9 = arith.constant 0 : index
    %10 = vector.load %arg5[%c0_8, %c0_9] : memref<1x3xf32, #tpu.memory_space<vmem>>, vector<1x3xf32>
    %11 = vector.broadcast %10 : vector<1x3xf32> to vector<2x3xf32>
    %12 = arith.addf %9, %11 : vector<2x3xf32>
    %c0_10 = arith.constant 0 : index
    %c0_11 = arith.constant 0 : index
    %13 = vector.load %arg6[%c0_10, %c0_11] : memref<2x3xf32, #tpu.memory_space<vmem>>, vector<2x3xf32>
    tpu.vector_store %arg6[%c0_10, %c0_11], %12 {strides = array<i32>} : memref<2x3xf32, #tpu.memory_space<vmem>>, vector<2x3xf32>,
    return
  }
  func.func @transform_0(%arg0: i32) -> (i32, i32) {
    %c0_i32 = arith.constant 0 : i32
    %c0_i32_0 = arith.constant 0 : i32
    %c0_i32_1 = arith.constant 0 : i32
    return %c0_i32, %c0_i32_0 : i32, i32
  }
  func.func @transform_1(%arg0: i32) -> (i32, i32) {
    %c0_i32 = arith.constant 0 : i32
    %c0_i32_0 = arith.constant 0 : i32
    %c0_i32_1 = arith.constant 0 : i32
    return %c0_i32, %c0_i32_0 : i32, i32
  }
  func.func @transform_2(%arg0: i32) -> (i32, i32) {
    %c0_i32 = arith.constant 0 : i32
    %c0_i32_0 = arith.constant 0 : i32
    %c0_i32_1 = arith.constant 0 : i32
    return %c0_i32, %c0_i32_0 : i32, i32
  }
  func.func @transform_3(%arg0: i32) -> (i32, i32) {
    %c0_i32 = arith.constant 0 : i32
    %c0_i32_0 = arith.constant 0 : i32
    %c0_i32_1 = arith.constant 0 : i32
    return %c0_i32, %c0_i32_0 : i32, i32
  }
  func.func @transform_4(%arg0: i32) -> (i32, i32) {
    %c0_i32 = arith.constant 0 : i32
    %c0_i32_0 = arith.constant 0 : i32
    %c0_i32_1 = arith.constant 0 : i32
    return %c0_i32, %c0_i32_0 : i32, i32
  }
  func.func @transform_5(%arg0: i32) -> (i32, i32) {
    %c0_i32 = arith.constant 0 : i32
    %c0_i32_0 = arith.constant 0 : i32
    %c0_i32_1 = arith.constant 0 : i32
    return %c0_i32, %c0_i32_0 : i32, i32
  }
}

</mosaic_0001>

<llo_original>
// kernel: bert_base_cased_forward.15
$region0: #{bert_base_cased_forward.15}
  #allocation0 [shape = 'u32[]', space=smem, size = 0x4, offset = 0x4, fixed_abs, tag = 'smem constant byte address 0x4 - core index']
  #allocation1 [shape = 'u32[144,128]{1,0:T(1,128)}', space=vmem, size = 0x12000, scoped, tag = 'internal scratch']
  #allocation2 [shape = 'f32[16,32]{1,0:T(8,128)}', space=vmem, size = 0x2000, scoped, tag = 'scratch operand']
  %s0 = inlined_call_operand.vmem [shape: bf16[16,32], index: 0, kind: input, shape index: {}]
  %s1 = inlined_call_operand.vmem [shape: bf16[32,32], index: 1, kind: input, shape index: {}]
  %s2 = inlined_call_operand.vmem [shape: f32[1,32], index: 2, kind: input, shape index: {}]
  %s3 = inlined_call_operand.vmem [shape: bf16[16,32], index: 3, kind: input, shape index: {}]
  %s4 = inlined_call_operand.vmem [shape: f32[1,32], index: 4, kind: input, shape index: {}]
  %s5 = inlined_call_operand.vmem [shape: f32[1,32], index: 5, kind: input, shape index: {}]
  %s6 = inlined_call_operand.vmem [shape: bf16[16,32], index: 6, kind: output, shape index: {}]
  %s7 = sld [smem:[#allocation0]]
  $region42: #{bert_base_cased_forward.15} parent=0
    _
  %s9 = ssub.s32 1, %s7
  %s10 = scalar_select 0, %s9, %s7
  // Predicated region
  $region2: #{bert_base_cased_forward.15} parent=0 // pred_check
    _
  $region3: #{bert_base_cased_forward.15} parent=0 // pred_check_branch
    %12 = sbr.rel (0) target = $region5
  $region4: #{bert_base_cased_forward.15} parent=0 // pred_region
    _
  $region5: #{bert_base_cased_forward.15} parent=0 // pred_fallthru
    _
  // Predicated region
  $region6: #{bert_base_cased_forward.15} parent=0 // pred_check
    _
  $region7: #{bert_base_cased_forward.15} parent=0 // pred_check_branch
    %14 = sbr.rel (0) target = $region9
  $region8: #{bert_base_cased_forward.15} parent=0 // pred_region
    _
  $region9: #{bert_base_cased_forward.15} parent=0 // pred_fallthru
    _
  // Predicated region
  $region10: #{bert_base_cased_forward.15} parent=0 // pred_check
    _
  $region11: #{bert_base_cased_forward.15} parent=0 // pred_check_branch
    %16 = sbr.rel (0) target = $region13
  $region12: #{bert_base_cased_forward.15} parent=0 // pred_region
    _
  $region13: #{bert_base_cased_forward.15} parent=0 // pred_fallthru
    _
  // Predicated region
  $region14: #{bert_base_cased_forward.15} parent=0 // pred_check
    _
  $region15: #{bert_base_cased_forward.15} parent=0 // pred_check_branch
    %18 = sbr.rel (0) target = $region17
  $region16: #{bert_base_cased_forward.15} parent=0 // pred_region
    _
  $region17: #{bert_base_cased_forward.15} parent=0 // pred_fallthru
    _
  // Predicated region
  $region18: #{bert_base_cased_forward.15} parent=0 // pred_check
    _
  $region19: #{bert_base_cased_forward.15} parent=0 // pred_check_branch
    %20 = sbr.rel (0) target = $region21
  $region20: #{bert_base_cased_forward.15} parent=0 // pred_region
    _
  $region21: #{bert_base_cased_forward.15} parent=0 // pred_fallthru
    _
  // Predicated region
  $region22: #{bert_base_cased_forward.15} parent=0 // pred_check
    _
  $region23: #{bert_base_cased_forward.15} parent=0 // pred_check_branch
    %22 = sbr.rel (0) target = $region25
  $region24: #{bert_base_cased_forward.15} parent=0 // pred_region
    _
  $region25: #{bert_base_cased_forward.15} parent=0 // pred_fallthru
    _
  %p24 = scmp.eq.s32.totalorder 0, 0
  // Predicated region
  $region26: #{bert_base_cased_forward.15} parent=0 // pred_check
    %p25 = pneg %p24
  $region27: #{bert_base_cased_forward.15} parent=0 // pred_check_branch
    %27 = sbr.rel (%p25) target = $region29
  $region28: #{bert_base_cased_forward.15} parent=0 // pred_region
    %vm28 = vcmask 261120
    %29 = vst.msk [vmem:[#allocation2] sm:$0xff] %vm28, 0.0
    %30 = vst.msk [vmem:[#allocation2 + $0x8] sm:$0xff] %vm28, 0.0
  $region29: #{bert_base_cased_forward.15} parent=0 // pred_fallthru
    _
  %v31 = vld [vmem:[#allocation2] sm:$0xff]
  %v32 = vld [vmem:[#allocation2 + $0x8] sm:$0xff]
  %v33 = vld [vmem:[%s0] sm:$0xf]
  %v34 = vld [vmem:[%s0 + $0x4] sm:$0xf]
  %v35 = vld [vmem:[%s1] sm:$0xf]
  %v36 = vld [vmem:[%s1 + $0x4] sm:$0xf]
  %v37 = vld [vmem:[%s1 + $0x8] sm:$0xf]
  %v38 = vld [vmem:[%s1 + $0xc] sm:$0xf]
  %v41 = vunpack.c.l.b16 %v33
  %v42 = vunpack.c.l.b16 %v34
  %v43 = vpack.c.b16 %v42, %v41
  %v48 = vunpack.c.l.b16 %v35
  %v49 = vunpack.c.l.b16 %v36
  %v50 = vunpack.c.l.b16 %v37
  %v51 = vunpack.c.l.b16 %v38
  %v52 = vpack.c.b16 %v49, %v48
  %v53 = vpack.c.b16 %v51, %v50
  %vm56 = vcmask 261120
  %v58 = vsel %vm56, %v43, 0
  %60 = vmatprep.subr.bf16.mxu0 0
  %61 = vmatpush1.bf16.msra.mxu0 %v52
  %62 = vmatprep.subr.bf16.mxu0 0
  %63 = vmatpush1.bf16.msra.mxu0 %v53
  %64 = vmatprep.subr.bf16.mxu0 0
  %65 = vmatpush1.bf16.msra.mxu0 0
  %66 = vmatprep.subr.bf16.mxu0 0
  %67 = vmatpush1.bf16.msra.mxu0 0
  %68 = vmatprep.subr.bf16.mxu0 0
  %69 = vmatpush1.bf16.msra.mxu0 0
  %70 = vmatprep.subr.bf16.mxu0 0
  %71 = vmatpush1.bf16.msra.mxu0 0
  %72 = vmatprep.subr.bf16.mxu0 0
  %73 = vmatpush1.bf16.msra.mxu0 0
  %74 = vmatprep.subr.bf16.mxu0 0
  %75 = vmatpush1.bf16.msra.mxu0 0
  %76 = vmatprep.subr.bf16.mxu0 0
  %77 = vmatpush1.bf16.msra.mxu0 0
  %78 = vmatprep.subr.bf16.mxu0 0
  %79 = vmatpush1.bf16.msra.mxu0 0
  %80 = vmatprep.subr.bf16.mxu0 0
  %81 = vmatpush1.bf16.msra.mxu0 0
  %82 = vmatprep.subr.bf16.mxu0 0
  %83 = vmatpush1.bf16.msra.mxu0 0
  %84 = vmatprep.subr.bf16.mxu0 0
  %85 = vmatpush1.bf16.msra.mxu0 0
  %86 = vmatprep.subr.bf16.mxu0 0
  %87 = vmatpush1.bf16.msra.mxu0 0
  %88 = vmatprep.subr.bf16.mxu0 0
  %89 = vmatpush1.bf16.msra.mxu0 0
  %90 = vmatprep.subr.bf16.mxu0 0
  %91 = vmatpush1.bf16.msra.mxu0 0
  %92 = vmatprep.mubr.bf16.mxu0 0
  %93 = vmatmul.mubr.bf16.gmra.mrb[0].mxu0 %v58
  %v94 = vpop.f32.mrb[0].mxu0
  %v95 = vadd.f32 0.0, %v94
  %v96 = vpop.f32.mrb[0].mxu0
  %v97 = vpop.f32.mrb[0].mxu0
  %v98 = vadd.f32 0.0, %v97
  %v99 = vpop.f32.mrb[0].mxu0
  %100 = vdwg.mxu0
  %v101 = vadd.f32 %v31, %v95
  %v102 = vadd.f32 %v32, %v98
  %103 = vst.msk [vmem:[#allocation2] sm:$0xff] %vm56, %v101
  %104 = vst.msk [vmem:[#allocation2 + $0x8] sm:$0xff] %vm56, %v102
  // Predicated region
  $region30: #{bert_base_cased_forward.15} parent=0 // pred_check
    %p105 = pneg %p24
  $region31: #{bert_base_cased_forward.15} parent=0 // pred_check_branch
    %107 = sbr.rel (%p105) target = $region33
  $region32: #{bert_base_cased_forward.15} parent=0 // pred_region
    %v108 = vld [vmem:[#allocation2] sm:$0xff]
    %v109 = vld [vmem:[#allocation2 + $0x8] sm:$0xff]
    %v110 = vld [vmem:[%s2] sm:$0x1]
    %v112 = vlaneseq
    %v113 = vshrl.u32 %v112, 7
    %v114 = vsub.s32 0, %v113
    %v115 = vrot.slane %v110, %v114
    %v117 = vadd.f32 %v108, %v115
    %v118 = vadd.f32 %v109, %v115
    %v119 = vld [vmem:[%s3] sm:$0xf]
    %v120 = vld [vmem:[%s3 + $0x4] sm:$0xf]
    %v121 = vunpack.c.l.bf16 %v119
    %v122 = vunpack.c.l.bf16 %v120
    %v123 = vadd.f32 %v117, %v121
    %v124 = vadd.f32 %v118, %v122
    %v125 = vsel %vm56, %v123, 0.0
    %126 = vadd.xlane.f32.xlu0 %v125
    %v127 = vpop.xlane.xlu0 %126
    %v128 = vsel %vm56, %v124, 0.0
    %129 = vadd.xlane.f32.xlu0 %v128
    %v130 = vpop.xlane.xlu0 %129
    %v131 = vrcp.pop 32.0
    %v132 = vmul.f32 %v127, %v131
    %v133 = vmul.f32 %v130, %v131
    %v134 = vsub.f32 %v123, %v132
    %v135 = vsub.f32 %v124, %v133
    %v136 = vmul.f32 %v134, %v134
    %v137 = vmul.f32 %v135, %v135
    %v138 = vsel %vm56, %v136, 0.0
    %139 = vadd.xlane.f32.xlu0 %v138
    %v140 = vpop.xlane.xlu0 %139
    %v141 = vsel %vm56, %v137, 0.0
    %142 = vadd.xlane.f32.xlu0 %v141
    %v143 = vpop.xlane.xlu0 %142
    %v144 = vmul.f32 %v140, %v131
    %v145 = vmul.f32 %v143, %v131
    %v146 = vadd.f32 %v144, 1e-12
    %v147 = vadd.f32 %v145, 1e-12
    %v148 = vrsqrt.pop %v146
    %v149 = vrsqrt.pop %v147
    %v150 = vmul.f32 %v134, %v148
    %v151 = vmul.f32 %v135, %v149
    %v152 = vld [vmem:[%s4] sm:$0x1]
    %v154 = vlaneseq
    %v155 = vshrl.u32 %v154, 7
    %v156 = vsub.s32 0, %v155
    %v157 = vrot.slane %v152, %v156
    %v159 = vmul.f32 %v150, %v157
    %v160 = vmul.f32 %v151, %v157
    %v161 = vld [vmem:[%s5] sm:$0x1]
    %v163 = vlaneseq
    %v164 = vshrl.u32 %v163, 7
    %v165 = vsub.s32 0, %v164
    %v166 = vrot.slane %v161, %v165
    %v168 = vadd.f32 %v159, %v166
    %v169 = vadd.f32 %v160, %v166
    %v170 = vpack.c.bf16 %v169, %v168
    %v172 = vunpack.c.l.b16 %v170
    %v173 = vunpack.c.h.b16 %v170
    %v174 = vpack.c.b16 %v172, %v172
    %v175 = vpack.c.b16 %v173, %v173
    %vm178 = vcmask 257024
    %179 = vst.msk [vmem:[%s6] sm:$0xf] %vm178, %v174
    %180 = vst.msk [vmem:[%s6 + $0x4] sm:$0xf] %vm178, %v175
  $region33: #{bert_base_cased_forward.15} parent=0 // pred_fallthru
    _
  // Predicated region
  $region34: #{bert_base_cased_forward.15} parent=0 // pred_check
    _
  $region35: #{bert_base_cased_forward.15} parent=0 // pred_check_branch
    %182 = sbr.rel (0) target = $region37
  $region36: #{bert_base_cased_forward.15} parent=0 // pred_region
    _
  $region37: #{bert_base_cased_forward.15} parent=0 // pred_fallthru
    _
  // Predicated region
  $region38: #{bert_base_cased_forward.15} parent=0 // pred_check
    _
  $region39: #{bert_base_cased_forward.15} parent=0 // pred_check_branch
    %184 = sbr.rel (0) target = $region41
  $region40: #{bert_base_cased_forward.15} parent=0 // pred_region
    _
  $region41: #{bert_base_cased_forward.15} parent=0 // pred_fallthru
    _

// kernel: bert_base_cased_forward.12
$region0: #{bert_base_cased_forward.12}
  #allocation0 [shape = 'u32[]', space=smem, size = 0x4, offset = 0x4, fixed_abs, tag = 'smem constant byte address 0x4 - core index']
  #allocation1 [shape = 'u32[144,128]{1,0:T(1,128)}', space=vmem, size = 0x12000, scoped, tag = 'internal scratch']
  %s0 = inlined_call_operand.vmem [shape: f32[16,32], index: 0, kind: input, shape index: {}]
  %s1 = inlined_call_operand.vmem [shape: f32[1,32], index: 1, kind: input, shape index: {}]
  %s2 = inlined_call_operand.vmem [shape: f32[1,32], index: 2, kind: input, shape index: {}]
  %s3 = inlined_call_operand.vmem [shape: bf16[16,32], index: 3, kind: output, shape index: {}]
  %s4 = sld [smem:[#allocation0]]
  $region22: #{bert_base_cased_forward.12} parent=0
    _
  %s6 = ssub.s32 1, %s4
  %s7 = scalar_select 0, %s6, %s4
  // Predicated region
  $region2: #{bert_base_cased_forward.12} parent=0 // pred_check
    _
  $region3: #{bert_base_cased_forward.12} parent=0 // pred_check_branch
    %9 = sbr.rel (0) target = $region5
  $region4: #{bert_base_cased_forward.12} parent=0 // pred_region
    _
  $region5: #{bert_base_cased_forward.12} parent=0 // pred_fallthru
    _
  // Predicated region
  $region6: #{bert_base_cased_forward.12} parent=0 // pred_check
    _
  $region7: #{bert_base_cased_forward.12} parent=0 // pred_check_branch
    %11 = sbr.rel (0) target = $region9
  $region8: #{bert_base_cased_forward.12} parent=0 // pred_region
    _
  $region9: #{bert_base_cased_forward.12} parent=0 // pred_fallthru
    _
  // Predicated region
  $region10: #{bert_base_cased_forward.12} parent=0 // pred_check
    _
  $region11: #{bert_base_cased_forward.12} parent=0 // pred_check_branch
    %13 = sbr.rel (0) target = $region13
  $region12: #{bert_base_cased_forward.12} parent=0 // pred_region
    _
  $region13: #{bert_base_cased_forward.12} parent=0 // pred_fallthru
    _
  %v14 = vld [vmem:[%s0] sm:$0xff]
  %v15 = vld [vmem:[%s0 + $0x8] sm:$0xff]
  %vm16 = vcmask 261120
  %v17 = vsel %vm16, %v14, 0.0
  %18 = vadd.xlane.f32.xlu0 %v17
  %v19 = vpop.xlane.xlu0 %18
  %v20 = vsel %vm16, %v15, 0.0
  %21 = vadd.xlane.f32.xlu0 %v20
  %v22 = vpop.xlane.xlu0 %21
  %v23 = vrcp.pop 32.0
  %v24 = vmul.f32 %v19, %v23
  %v25 = vmul.f32 %v22, %v23
  %v26 = vsub.f32 %v14, %v24
  %v27 = vsub.f32 %v15, %v25
  %v28 = vmul.f32 %v26, %v26
  %v29 = vmul.f32 %v27, %v27
  %v30 = vsel %vm16, %v28, 0.0
  %31 = vadd.xlane.f32.xlu0 %v30
  %v32 = vpop.xlane.xlu0 %31
  %v33 = vsel %vm16, %v29, 0.0
  %34 = vadd.xlane.f32.xlu0 %v33
  %v35 = vpop.xlane.xlu0 %34
  %v36 = vmul.f32 %v32, %v23
  %v37 = vmul.f32 %v35, %v23
  %v38 = vadd.f32 %v36, 1e-12
  %v39 = vadd.f32 %v37, 1e-12
  %v40 = vrsqrt.pop %v38
  %v41 = vrsqrt.pop %v39
  %v42 = vmul.f32 %v26, %v40
  %v43 = vmul.f32 %v27, %v41
  %v44 = vld [vmem:[%s1] sm:$0x1]
  %v46 = vlaneseq
  %v47 = vshrl.u32 %v46, 7
  %v48 = vsub.s32 0, %v47
  %v49 = vrot.slane %v44, %v48
  %v51 = vmul.f32 %v42, %v49
  %v52 = vmul.f32 %v43, %v49
  %v53 = vld [vmem:[%s2] sm:$0x1]
  %v55 = vlaneseq
  %v56 = vshrl.u32 %v55, 7
  %v57 = vsub.s32 0, %v56
  %v58 = vrot.slane %v53, %v57
  %v60 = vadd.f32 %v51, %v58
  %v61 = vadd.f32 %v52, %v58
  %v62 = vpack.c.bf16 %v61, %v60
  %v64 = vunpack.c.l.b16 %v62
  %v65 = vunpack.c.h.b16 %v62
  %v66 = vpack.c.b16 %v64, %v64
  %v67 = vpack.c.b16 %v65, %v65
  %vm70 = vcmask 257024
  %71 = vst.msk [vmem:[%s3] sm:$0xf] %vm70, %v66
  %72 = vst.msk [vmem:[%s3 + $0x4] sm:$0xf] %vm70, %v67
  // Predicated region
  $region14: #{bert_base_cased_forward.12} parent=0 // pred_check
    _
  $region15: #{bert_base_cased_forward.12} parent=0 // pred_check_branch
    %74 = sbr.rel (0) target = $region17
  $region16: #{bert_base_cased_forward.12} parent=0 // pred_region
    _
  $region17: #{bert_base_cased_forward.12} parent=0 // pred_fallthru
    _
  // Predicated region
  $region18: #{bert_base_cased_forward.12} parent=0 // pred_check
    _
  $region19: #{bert_base_cased_forward.12} parent=0 // pred_check_branch
    %76 = sbr.rel (0) target = $region21
  $region20: #{bert_base_cased_forward.12} parent=0 // pred_region
    _
  $region21: #{bert_base_cased_forward.12} parent=0 // pred_fallthru
    _

// kernel: bert_base_cased_forward.13
$region0: #{bert_base_cased_forward.13}
  #allocation0 [shape = 'u32[]', space=smem, size = 0x4, offset = 0x4, fixed_abs, tag = 'smem constant byte address 0x4 - core index']
  #allocation1 [shape = 'u32[144,128]{1,0:T(1,128)}', space=vmem, size = 0x12000, scoped, tag = 'internal scratch']
  #allocation2 [shape = 'f32[16,96]{1,0:T(8,128)}', space=vmem, size = 0x2000, scoped, tag = 'scratch operand']
  %s0 = inlined_call_operand.vmem [shape: bf16[16,32], index: 0, kind: input, shape index: {}]
  %s1 = inlined_call_operand.vmem [shape: bf16[32,96], index: 1, kind: input, shape index: {}]
  %s2 = inlined_call_operand.vmem [shape: f32[1,96], index: 2, kind: input, shape index: {}]
  %s3 = inlined_call_operand.vmem [shape: bf16[16,96], index: 3, kind: output, shape index: {}]
  %s4 = sld [smem:[#allocation0]]
  $region30: #{bert_base_cased_forward.13} parent=0
    _
  %s6 = ssub.s32 1, %s4
  %s7 = scalar_select 0, %s6, %s4
  // Predicated region
  $region2: #{bert_base_cased_forward.13} parent=0 // pred_check
    _
  $region3: #{bert_base_cased_forward.13} parent=0 // pred_check_branch
    %9 = sbr.rel (0) target = $region5
  $region4: #{bert_base_cased_forward.13} parent=0 // pred_region
    _
  $region5: #{bert_base_cased_forward.13} parent=0 // pred_fallthru
    _
  // Predicated region
  $region6: #{bert_base_cased_forward.13} parent=0 // pred_check
    _
  $region7: #{bert_base_cased_forward.13} parent=0 // pred_check_branch
    %11 = sbr.rel (0) target = $region9
  $region8: #{bert_base_cased_forward.13} parent=0 // pred_region
    _
  $region9: #{bert_base_cased_forward.13} parent=0 // pred_fallthru
    _
  // Predicated region
  $region10: #{bert_base_cased_forward.13} parent=0 // pred_check
    _
  $region11: #{bert_base_cased_forward.13} parent=0 // pred_check_branch
    %13 = sbr.rel (0) target = $region13
  $region12: #{bert_base_cased_forward.13} parent=0 // pred_region
    _
  $region13: #{bert_base_cased_forward.13} parent=0 // pred_fallthru
    _
  %p15 = scmp.eq.s32.totalorder 0, 0
  // Predicated region
  $region14: #{bert_base_cased_forward.13} parent=0 // pred_check
    %p16 = pneg %p15
  $region15: #{bert_base_cased_forward.13} parent=0 // pred_check_branch
    %18 = sbr.rel (%p16) target = $region17
  $region16: #{bert_base_cased_forward.13} parent=0 // pred_region
    %vm19 = vcmask 785408
    %20 = vst.msk [vmem:[#allocation2] sm:$0xff] %vm19, 0.0
    %21 = vst.msk [vmem:[#allocation2 + $0x8] sm:$0xff] %vm19, 0.0
  $region17: #{bert_base_cased_forward.13} parent=0 // pred_fallthru
    _
  %v22 = vld [vmem:[#allocation2] sm:$0xff]
  %v23 = vld [vmem:[#allocation2 + $0x8] sm:$0xff]
  %v24 = vld [vmem:[%s0] sm:$0xf]
  %v25 = vld [vmem:[%s0 + $0x4] sm:$0xf]
  %v26 = vld [vmem:[%s1] sm:$0xf]
  %v27 = vld [vmem:[%s1 + $0x4] sm:$0xf]
  %v28 = vld [vmem:[%s1 + $0x8] sm:$0xf]
  %v29 = vld [vmem:[%s1 + $0xc] sm:$0xf]
  %v32 = vunpack.c.l.b16 %v24
  %v33 = vunpack.c.l.b16 %v25
  %v34 = vpack.c.b16 %v33, %v32
  %v39 = vunpack.c.l.b16 %v26
  %v40 = vunpack.c.l.b16 %v27
  %v41 = vunpack.c.l.b16 %v28
  %v42 = vunpack.c.l.b16 %v29
  %v43 = vpack.c.b16 %v40, %v39
  %v44 = vpack.c.b16 %v42, %v41
  %vm47 = vcmask 261120
  %v49 = vsel %vm47, %v34, 0
  %51 = vmatprep.subr.bf16.mxu0 0
  %52 = vmatpush1.bf16.msra.mxu0 %v43
  %53 = vmatprep.subr.bf16.mxu0 0
  %54 = vmatpush1.bf16.msra.mxu0 %v44
  %55 = vmatprep.subr.bf16.mxu0 0
  %56 = vmatpush1.bf16.msra.mxu0 0
  %57 = vmatprep.subr.bf16.mxu0 0
  %58 = vmatpush1.bf16.msra.mxu0 0
  %59 = vmatprep.subr.bf16.mxu0 0
  %60 = vmatpush1.bf16.msra.mxu0 0
  %61 = vmatprep.subr.bf16.mxu0 0
  %62 = vmatpush1.bf16.msra.mxu0 0
  %63 = vmatprep.subr.bf16.mxu0 0
  %64 = vmatpush1.bf16.msra.mxu0 0
  %65 = vmatprep.subr.bf16.mxu0 0
  %66 = vmatpush1.bf16.msra.mxu0 0
  %67 = vmatprep.subr.bf16.mxu0 0
  %68 = vmatpush1.bf16.msra.mxu0 0
  %69 = vmatprep.subr.bf16.mxu0 0
  %70 = vmatpush1.bf16.msra.mxu0 0
  %71 = vmatprep.subr.bf16.mxu0 0
  %72 = vmatpush1.bf16.msra.mxu0 0
  %73 = vmatprep.subr.bf16.mxu0 0
  %74 = vmatpush1.bf16.msra.mxu0 0
  %75 = vmatprep.subr.bf16.mxu0 0
  %76 = vmatpush1.bf16.msra.mxu0 0
  %77 = vmatprep.subr.bf16.mxu0 0
  %78 = vmatpush1.bf16.msra.mxu0 0
  %79 = vmatprep.subr.bf16.mxu0 0
  %80 = vmatpush1.bf16.msra.mxu0 0
  %81 = vmatprep.subr.bf16.mxu0 0
  %82 = vmatpush1.bf16.msra.mxu0 0
  %83 = vmatprep.mubr.bf16.mxu0 0
  %84 = vmatmul.mubr.bf16.gmra.mrb[0].mxu0 %v49
  %v85 = vpop.f32.mrb[0].mxu0
  %v86 = vadd.f32 0.0, %v85
  %v87 = vpop.f32.mrb[0].mxu0
  %v88 = vpop.f32.mrb[0].mxu0
  %v89 = vadd.f32 0.0, %v88
  %v90 = vpop.f32.mrb[0].mxu0
  %91 = vdwg.mxu0
  %v92 = vadd.f32 %v22, %v86
  %v93 = vadd.f32 %v23, %v89
  %vm94 = vcmask 785408
  %95 = vst.msk [vmem:[#allocation2] sm:$0xff] %vm94, %v92
  %96 = vst.msk [vmem:[#allocation2 + $0x8] sm:$0xff] %vm94, %v93
  // Predicated region
  $region18: #{bert_base_cased_forward.13} parent=0 // pred_check
    %p97 = pneg %p15
  $region19: #{bert_base_cased_forward.13} parent=0 // pred_check_branch
    %99 = sbr.rel (%p97) target = $region21
  $region20: #{bert_base_cased_forward.13} parent=0 // pred_region
    %v100 = vld [vmem:[#allocation2] sm:$0xff]
    %v101 = vld [vmem:[#allocation2 + $0x8] sm:$0xff]
    %v102 = vld [vmem:[%s2] sm:$0x1]
    %v104 = vlaneseq
    %v105 = vshrl.u32 %v104, 7
    %v106 = vsub.s32 0, %v105
    %v107 = vrot.slane %v102, %v106
    %v109 = vadd.f32 %v100, %v107
    %v110 = vadd.f32 %v101, %v107
    %v111 = vpack.c.bf16 %v110, %v109
    %v113 = vunpack.c.l.b16 %v111
    %v114 = vunpack.c.h.b16 %v111
    %v115 = vpack.c.b16 %v113, %v113
    %v116 = vpack.c.b16 %v114, %v114
    %vm119 = vcmask 781312
    %120 = vst.msk [vmem:[%s3] sm:$0xf] %vm119, %v115
    %121 = vst.msk [vmem:[%s3 + $0x4] sm:$0xf] %vm119, %v116
  $region21: #{bert_base_cased_forward.13} parent=0 // pred_fallthru
    _
  // Predicated region
  $region22: #{bert_base_cased_forward.13} parent=0 // pred_check
    _
  $region23: #{bert_base_cased_forward.13} parent=0 // pred_check_branch
    %123 = sbr.rel (0) target = $region25
  $region24: #{bert_base_cased_forward.13} parent=0 // pred_region
    _
  $region25: #{bert_base_cased_forward.13} parent=0 // pred_fallthru
    _
  // Predicated region
  $region26: #{bert_base_cased_forward.13} parent=0 // pred_check
    _
  $region27: #{bert_base_cased_forward.13} parent=0 // pred_check_branch
    %125 = sbr.rel (0) target = $region29
  $region28: #{bert_base_cased_forward.13} parent=0 // pred_region
    _
  $region29: #{bert_base_cased_forward.13} parent=0 // pred_fallthru
    _

// kernel: bert_base_cased_forward.14
$region0: #{bert_base_cased_forward.14}
  #allocation0 [shape = 'u32[]', space=smem, size = 0x4, offset = 0x4, fixed_abs, tag = 'smem constant byte address 0x4 - core index']
  #allocation1 [shape = 'u32[144,128]{1,0:T(1,128)}', space=vmem, size = 0x12000, scoped, tag = 'internal scratch']
  %s0 = inlined_call_operand.vmem [shape: bf16[2,8,96], index: 0, kind: input, shape index: {}]
  %s1 = inlined_call_operand.vmem [shape: f32[2,1,8], index: 1, kind: input, shape index: {}]
  %s2 = inlined_call_operand.vmem [shape: bf16[2,8,32], index: 2, kind: output, shape index: {}]
  %s3 = sld [smem:[#allocation0]]
  $region41: #{bert_base_cased_forward.14} parent=0
    _
  %s5 = ssub.s32 1, %s3
  %s6 = scalar_select 0, %s5, %s3
  loop: start=0, step=1, limit=4
  $region2: #{bert_base_cased_forward.14} parent=0 // loop_pre_header
    _
  $region3: #{bert_base_cased_forward.14} parent=0 // loop_header
    %s8 = sphi 0, %s12
    %p9 = scmp.ge.s32.totalorder %s8, 4
    %s18 = sphi 0, %s20
    %s21 = sphi 0, %s18
    %s22 = sphi 0, %s21
    %s38 = sphi 0, %s22
    %s44 = sphi 0, %s46
    %s47 = sphi 0, %s44
    %s48 = sphi 0, %s47
    %s64 = sphi 0, %s48
    %s70 = sphi 0, %s72
    %s73 = sphi 0, %s70
    %s74 = sphi 0, %s73
    %s90 = sphi 0, %s74
  $region4: #{bert_base_cased_forward.14} parent=0 // loop_header_branch
    %11 = sbr.rel (%p9) target = $region8
  $region5: #{bert_base_cased_forward.14} parent=0 // loop_body
    %s13 = ssub.s32 %s8, 1
    %s14 = ssub.s32 %s8, 2
    %s15 = sadd.s32 %s8, 1
    %s16 = ssub.s32 %s8, %s15
    %p17 = scmp.eq.s32.totalorder %s16, 0
    %s19 = sadd.s32 %s18, 1
    %s20 = scalar_select %p17, %s18, %s19
    %p23 = pneg %p17
    %p24 = scmp.eq.s32.totalorder %s8, 1
    %p25 = por %p23, %p24
    %p26 = scmp.ne.s32.totalorder %s18, %s21
    %p27 = scmp.eq.s32.totalorder %s8, 0
    %p28 = por %p26, %p27
    %p29 = scmp.ne.s32.totalorder %s18, %s21
    %p30 = scmp.eq.s32.totalorder %s13, 1
    %p31 = por %p29, %p30
    %p32 = scmp.ne.s32.totalorder %s21, %s22
    %p33 = scmp.eq.s32.totalorder %s13, 0
    %p34 = por %p32, %p33
    %p35 = scmp.ne.s32.totalorder %s21, %s22
    %p36 = scmp.eq.s32.totalorder %s14, 1
    %p37 = por %p35, %p36
    %p39 = scmp.ne.s32.totalorder %s22, %s38
    %p40 = scmp.eq.s32.totalorder %s14, 0
    %p41 = por %p39, %p40
    %s42 = ssub.s32 %s8, %s15
    %p43 = scmp.eq.s32.totalorder %s42, 0
    %s45 = sadd.s32 %s44, 1
    %s46 = scalar_select %p43, %s44, %s45
    %p49 = pneg %p43
    %p50 = scmp.eq.s32.totalorder %s8, 1
    %p51 = por %p49, %p50
    %p52 = scmp.ne.s32.totalorder %s44, %s47
    %p53 = scmp.eq.s32.totalorder %s8, 0
    %p54 = por %p52, %p53
    %p55 = scmp.ne.s32.totalorder %s44, %s47
    %p56 = scmp.eq.s32.totalorder %s13, 1
    %p57 = por %p55, %p56
    %p58 = scmp.ne.s32.totalorder %s47, %s48
    %p59 = scmp.eq.s32.totalorder %s13, 0
    %p60 = por %p58, %p59
    %p61 = scmp.ne.s32.totalorder %s47, %s48
    %p62 = scmp.eq.s32.totalorder %s14, 1
    %p63 = por %p61, %p62
    %p65 = scmp.ne.s32.totalorder %s48, %s64
    %p66 = scmp.eq.s32.totalorder %s14, 0
    %p67 = por %p65, %p66
    %s68 = ssub.s32 %s8, %s15
    %p69 = scmp.eq.s32.totalorder %s68, 0
    %s71 = sadd.s32 %s70, 1
    %s72 = scalar_select %p69, %s70, %s71
    %p75 = pneg %p69
    %p76 = scmp.eq.s32.totalorder %s8, 1
    %p77 = por %p75, %p76
    %p78 = scmp.ne.s32.totalorder %s70, %s73
    %p79 = scmp.eq.s32.totalorder %s8, 0
    %p80 = por %p78, %p79
    %p81 = scmp.ne.s32.totalorder %s70, %s73
    %p82 = scmp.eq.s32.totalorder %s13, 1
    %p83 = por %p81, %p82
    %p84 = scmp.ne.s32.totalorder %s73, %s74
    %p85 = scmp.eq.s32.totalorder %s13, 0
    %p86 = por %p84, %p85
    %p87 = scmp.ne.s32.totalorder %s73, %s74
    %p88 = scmp.eq.s32.totalorder %s14, 1
    %p89 = por %p87, %p88
    %p91 = scmp.ne.s32.totalorder %s74, %s90
    %p92 = scmp.eq.s32.totalorder %s14, 0
    %p93 = por %p91, %p92
    %p94 = scmp.le.s32.totalorder 1, %s8
    %p95 = scmp.lt.s32.totalorder %s8, 3
    %p96 = pnand %p94, %p95
    %p97 = pneg %p96
    // Predicated region
    $region9: #{bert_base_cased_forward.14} parent=5 // pred_check
      _
    $region10: #{bert_base_cased_forward.14} parent=5 // pred_check_branch
      %99 = sbr.rel (%p96) target = $region12
    $region11: #{bert_base_cased_forward.14} parent=5 // pred_region
      %s100 = ssub.s32 %s8, 1
    $region12: #{bert_base_cased_forward.14} parent=5 // pred_fallthru
      _
    %p101 = scmp.lt.s32.totalorder %s8, 2
    // Predicated region
    $region13: #{bert_base_cased_forward.14} parent=5 // pred_check
      %p102 = pneg %p101
    $region14: #{bert_base_cased_forward.14} parent=5 // pred_check_branch
      %104 = sbr.rel (%p102) target = $region16
    $region15: #{bert_base_cased_forward.14} parent=5 // pred_region
      // Predicated region
      $region17: #{bert_base_cased_forward.14} parent=15 // pred_check
        %p105 = pneg %p28
      $region18: #{bert_base_cased_forward.14} parent=15 // pred_check_branch
        %107 = sbr.rel (%p105) target = $region20
      $region19: #{bert_base_cased_forward.14} parent=15 // pred_region
        %p108 = scmp.lt.s32.totalorder %s8, 1
        %s109 = scalar_select %p108, %s8, 1
        %s110 = smul.addr %s109, 4
        %s111 = scalar_lea.vmem %s0, %s110
      $region20: #{bert_base_cased_forward.14} parent=15 // pred_fallthru
        _
      // Predicated region
      $region21: #{bert_base_cased_forward.14} parent=15 // pred_check
        %p112 = pneg %p54
      $region22: #{bert_base_cased_forward.14} parent=15 // pred_check_branch
        %114 = sbr.rel (%p112) target = $region24
      $region23: #{bert_base_cased_forward.14} parent=15 // pred_region
        %p115 = scmp.lt.s32.totalorder %s8, 1
        %s116 = scalar_select %p115, %s8, 1
        %s117 = scalar_lea.vmem %s1, %s116
      $region24: #{bert_base_cased_forward.14} parent=15 // pred_fallthru
        _
    $region16: #{bert_base_cased_forward.14} parent=5 // pred_fallthru
      _
    %p118 = scmp.le.s32.totalorder 1, %s8
    %p119 = scmp.lt.s32.totalorder %s8, 3
    %p120 = pnand %p118, %p119
    %p121 = pneg %p120
    // Predicated region
    $region25: #{bert_base_cased_forward.14} parent=5 // pred_check
      _
    $region26: #{bert_base_cased_forward.14} parent=5 // pred_check_branch
      %123 = sbr.rel (%p120) target = $region28
    $region27: #{bert_base_cased_forward.14} parent=5 // pred_region
      %s124 = ssub.s32 %s8, 1
      %p125 = scmp.lt.s32.totalorder %s13, 1
      %s126 = scalar_select %p125, %s13, 1
      %s127 = smul.addr %s126, 4
      %s128 = scalar_lea.vmem %s0, %s127
      %p129 = pneg %p34
      %p130 = pneg %p31
      %p131 = scmp.lt.s32.totalorder %s13, 1
      %s132 = scalar_select %p131, %s13, 1
      %s133 = scalar_lea.vmem %s1, %s132
      %p134 = pneg %p60
      %p135 = pneg %p57
      %p136 = pneg %p86
      %p137 = pneg %p83
      %p138 = scmp.lt.s32.totalorder %s13, 1
      %s139 = scalar_select %p138, %s13, 1
      %s140 = smul.addr %s139, 4
      %s141 = scalar_lea.vmem %s2, %s140
      %p142 = scmp.lt.s32.totalorder %s13, 1
      %s143 = scalar_select %p142, %s13, 1
      %s144 = smul.addr %s143, 4
      %s145 = scalar_lea.vmem %s0, %s144
      %p146 = scmp.lt.s32.totalorder %s13, 1
      %s147 = scalar_select %p146, %s13, 1
      %s148 = scalar_lea.vmem %s1, %s147
      %p149 = scmp.lt.s32.totalorder %s13, 1
      %s150 = scalar_select %p149, %s13, 1
      %s151 = smul.addr %s150, 4
      %s152 = scalar_lea.vmem %s2, %s151
      %v154 = vld [vmem:[%s145] sm:$0xf]
      %v155 = vld [vmem:[%s148] sm:$0x1]
      %v157 = vunpack.c.l.b16 %v154
      %v158 = vpack.c.b16 %v157, %v157
      %159 = vrot.lane.b32.xlu0 %v158, 96
      %v160 = vpop.permute.xlu0 %159
      %vm161 = vcmask 64512
      %v163 = vsel %vm161, %v154, 0
      %v166 = vsel %vm161, %v160, 0
      %168 = vmatprep.subr.bf16.mxu0 0
      %169 = vmatpush1.bf16.xpose.msra.mxu0 %v166
      %170 = vmatprep.subr.bf16.mxu0 0
      %171 = vmatpush1.bf16.xpose.msra.mxu0 0
      %172 = vmatprep.subr.bf16.mxu0 0
      %173 = vmatpush1.bf16.xpose.msra.mxu0 0
      %174 = vmatprep.subr.bf16.mxu0 0
      %175 = vmatpush1.bf16.xpose.msra.mxu0 0
      %176 = vmatprep.subr.bf16.mxu0 0
      %177 = vmatpush1.bf16.xpose.msra.mxu0 0
      %178 = vmatprep.subr.bf16.mxu0 0
      %179 = vmatpush1.bf16.xpose.msra.mxu0 0
      %180 = vmatprep.subr.bf16.mxu0 0
      %181 = vmatpush1.bf16.xpose.msra.mxu0 0
      %182 = vmatprep.subr.bf16.mxu0 0
      %183 = vmatpush1.bf16.xpose.msra.mxu0 0
      %184 = vmatprep.subr.bf16.mxu0 0
      %185 = vmatpush1.bf16.xpose.msra.mxu0 0
      %186 = vmatprep.subr.bf16.mxu0 0
      %187 = vmatpush1.bf16.xpose.msra.mxu0 0
      %188 = vmatprep.subr.bf16.mxu0 0
      %189 = vmatpush1.bf16.xpose.msra.mxu0 0
      %190 = vmatprep.subr.bf16.mxu0 0
      %191 = vmatpush1.bf16.xpose.msra.mxu0 0
      %192 = vmatprep.subr.bf16.mxu0 0
      %193 = vmatpush1.bf16.xpose.msra.mxu0 0
      %194 = vmatprep.subr.bf16.mxu0 0
      %195 = vmatpush1.bf16.xpose.msra.mxu0 0
      %196 = vmatprep.subr.bf16.mxu0 0
      %197 = vmatpush1.bf16.xpose.msra.mxu0 0
      %198 = vmatprep.subr.bf16.mxu0 0
      %199 = vmatpush1.bf16.xpose.msra.mxu0 0
      %200 = vmatprep.mubr.bf16.mxu0 0
      %201 = vmatmul.mubr.bf16.gmra.mrb[0].mxu0 %v163
      %v202 = vpop.f32.mrb[0].mxu0
      %v203 = vadd.f32 0.0, %v202
      %v204 = vpop.f32.mrb[0].mxu0
      %v205 = vpop.f32.mrb[0].mxu0
      %v206 = vpop.f32.mrb[0].mxu0
      %207 = vdwg.mxu0
      %v208 = vmul.f32 %v203, 0.35355338
      %v210 = vlaneseq
      %v211 = vshrl.u32 %v210, 7
      %v212 = vsub.s32 0, %v211
      %v213 = vrot.slane %v155, %v212
      %v215 = vadd.f32 %v208, %v213
      %v216 = vsel %vm161, %v215, -inf
      %217 = vmax.xlane.f32.xlu0 %v216
      %v218 = vpop.xlane.xlu0 %217
      %v219 = vsub.f32 %v215, %v218
      %v220 = vmul.f32 %v219, 1.442695
      %v221 = vpow.pop %v220
      %v222 = vsel %vm161, %v221, 0.0
      %223 = vadd.xlane.f32.xlu0 %v222
      %v224 = vpop.xlane.xlu0 %223
      %v225 = vrcp.pop %v224
      %v226 = vmul.f32 %v221, %v225
      %v227 = vpack.c.bf16 %v226, %v226
      %228 = vrot.lane.b32.xlu0 %v158, 64
      %v229 = vpop.permute.xlu0 %228
      %v231 = vsel %vm161, %v227, 0
      %vm233 = vcmask 1043456
      %v235 = vsel %vm233, %v229, 0
      %237 = vmatprep.subr.bf16.mxu0 0
      %238 = vmatpush1.bf16.msra.mxu0 %v235
      %239 = vmatprep.subr.bf16.mxu0 0
      %240 = vmatpush1.bf16.msra.mxu0 0
      %241 = vmatprep.subr.bf16.mxu0 0
      %242 = vmatpush1.bf16.msra.mxu0 0
      %243 = vmatprep.subr.bf16.mxu0 0
      %244 = vmatpush1.bf16.msra.mxu0 0
      %245 = vmatprep.subr.bf16.mxu0 0
      %246 = vmatpush1.bf16.msra.mxu0 0
      %247 = vmatprep.subr.bf16.mxu0 0
      %248 = vmatpush1.bf16.msra.mxu0 0
      %249 = vmatprep.subr.bf16.mxu0 0
      %250 = vmatpush1.bf16.msra.mxu0 0
      %251 = vmatprep.subr.bf16.mxu0 0
      %252 = vmatpush1.bf16.msra.mxu0 0
      %253 = vmatprep.subr.bf16.mxu0 0
      %254 = vmatpush1.bf16.msra.mxu0 0
      %255 = vmatprep.subr.bf16.mxu0 0
      %256 = vmatpush1.bf16.msra.mxu0 0
      %257 = vmatprep.subr.bf16.mxu0 0
      %258 = vmatpush1.bf16.msra.mxu0 0
      %259 = vmatprep.subr.bf16.mxu0 0
      %260 = vmatpush1.bf16.msra.mxu0 0
      %261 = vmatprep.subr.bf16.mxu0 0
      %262 = vmatpush1.bf16.msra.mxu0 0
      %263 = vmatprep.subr.bf16.mxu0 0
      %264 = vmatpush1.bf16.msra.mxu0 0
      %265 = vmatprep.subr.bf16.mxu0 0
      %266 = vmatpush1.bf16.msra.mxu0 0
      %267 = vmatprep.subr.bf16.mxu0 0
      %268 = vmatpush1.bf16.msra.mxu0 0
      %269 = vmatprep.mubr.bf16.mxu0 0
      %270 = vmatmul.mubr.bf16.gmra.mrb[0].mxu0 %v231
      %v271 = vpop.f32.mrb[0].mxu0
      %v272 = vadd.f32 0.0, %v271
      %v273 = vpop.f32.mrb[0].mxu0
      %v274 = vpop.f32.mrb[0].mxu0
      %v275 = vpop.f32.mrb[0].mxu0
      %276 = vdwg.mxu0
      %277 = vrot.lane.b32.xlu0 %v158, 120
      %v278 = vpop.permute.xlu0 %277
      %279 = vrot.lane.b32.xlu0 %v158, 88
      %v280 = vpop.permute.xlu0 %279
      %v282 = vsel %vm161, %v278, 0
      %v285 = vsel %vm161, %v280, 0
      %287 = vmatprep.subr.bf16.mxu0 0
      %288 = vmatpush1.bf16.xpose.msra.mxu0 %v285
      %289 = vmatprep.subr.bf16.mxu0 0
      %290 = vmatpush1.bf16.xpose.msra.mxu0 0
      %291 = vmatprep.subr.bf16.mxu0 0
      %292 = vmatpush1.bf16.xpose.msra.mxu0 0
      %293 = vmatprep.subr.bf16.mxu0 0
      %294 = vmatpush1.bf16.xpose.msra.mxu0 0
      %295 = vmatprep.subr.bf16.mxu0 0
      %296 = vmatpush1.bf16.xpose.msra.mxu0 0
      %297 = vmatprep.subr.bf16.mxu0 0
      %298 = vmatpush1.bf16.xpose.msra.mxu0 0
      %299 = vmatprep.subr.bf16.mxu0 0
      %300 = vmatpush1.bf16.xpose.msra.mxu0 0
      %301 = vmatprep.subr.bf16.mxu0 0
      %302 = vmatpush1.bf16.xpose.msra.mxu0 0
      %303 = vmatprep.subr.bf16.mxu0 0
      %304 = vmatpush1.bf16.xpose.msra.mxu0 0
      %305 = vmatprep.subr.bf16.mxu0 0
      %306 = vmatpush1.bf16.xpose.msra.mxu0 0
      %307 = vmatprep.subr.bf16.mxu0 0
      %308 = vmatpush1.bf16.xpose.msra.mxu0 0
      %309 = vmatprep.subr.bf16.mxu0 0
      %310 = vmatpush1.bf16.xpose.msra.mxu0 0
      %311 = vmatprep.subr.bf16.mxu0 0
      %312 = vmatpush1.bf16.xpose.msra.mxu0 0
      %313 = vmatprep.subr.bf16.mxu0 0
      %314 = vmatpush1.bf16.xpose.msra.mxu0 0
      %315 = vmatprep.subr.bf16.mxu0 0
      %316 = vmatpush1.bf16.xpose.msra.mxu0 0
      %317 = vmatprep.subr.bf16.mxu0 0
      %318 = vmatpush1.bf16.xpose.msra.mxu0 0
      %319 = vmatprep.mubr.bf16.mxu0 0
      %320 = vmatmul.mubr.bf16.gmra.mrb[0].mxu0 %v282
      %v321 = vpop.f32.mrb[0].mxu0
      %v322 = vadd.f32 0.0, %v321
      %v323 = vpop.f32.mrb[0].mxu0
      %v324 = vpop.f32.mrb[0].mxu0
      %v325 = vpop.f32.mrb[0].mxu0
      %326 = vdwg.mxu0
      %v327 = vmul.f32 %v322, 0.35355338
      %v328 = vadd.f32 %v327, %v213
      %v329 = vsel %vm161, %v328, -inf
      %330 = vmax.xlane.f32.xlu0 %v329
      %v331 = vpop.xlane.xlu0 %330
      %v332 = vsub.f32 %v328, %v331
      %v333 = vmul.f32 %v332, 1.442695
      %v334 = vpow.pop %v333
      %v335 = vsel %vm161, %v334, 0.0
      %336 = vadd.xlane.f32.xlu0 %v335
      %v337 = vpop.xlane.xlu0 %336
      %v338 = vrcp.pop %v337
      %v339 = vmul.f32 %v334, %v338
      %v340 = vpack.c.bf16 %v339, %v339
      %341 = vrot.lane.b32.xlu0 %v158, 56
      %v342 = vpop.permute.xlu0 %341
      %v344 = vsel %vm161, %v340, 0
      %v347 = vsel %vm233, %v342, 0
      %349 = vmatprep.subr.bf16.mxu0 0
      %350 = vmatpush1.bf16.msra.mxu0 %v347
      %351 = vmatprep.subr.bf16.mxu0 0
      %352 = vmatpush1.bf16.msra.mxu0 0
      %353 = vmatprep.subr.bf16.mxu0 0
      %354 = vmatpush1.bf16.msra.mxu0 0
      %355 = vmatprep.subr.bf16.mxu0 0
      %356 = vmatpush1.bf16.msra.mxu0 0
      %357 = vmatprep.subr.bf16.mxu0 0
      %358 = vmatpush1.bf16.msra.mxu0 0
      %359 = vmatprep.subr.bf16.mxu0 0
      %360 = vmatpush1.bf16.msra.mxu0 0
      %361 = vmatprep.subr.bf16.mxu0 0
      %362 = vmatpush1.bf16.msra.mxu0 0
      %363 = vmatprep.subr.bf16.mxu0 0
      %364 = vmatpush1.bf16.msra.mxu0 0
      %365 = vmatprep.subr.bf16.mxu0 0
      %366 = vmatpush1.bf16.msra.mxu0 0
      %367 = vmatprep.subr.bf16.mxu0 0
      %368 = vmatpush1.bf16.msra.mxu0 0
      %369 = vmatprep.subr.bf16.mxu0 0
      %370 = vmatpush1.bf16.msra.mxu0 0
      %371 = vmatprep.subr.bf16.mxu0 0
      %372 = vmatpush1.bf16.msra.mxu0 0
      %373 = vmatprep.subr.bf16.mxu0 0
      %374 = vmatpush1.bf16.msra.mxu0 0
      %375 = vmatprep.subr.bf16.mxu0 0
      %376 = vmatpush1.bf16.msra.mxu0 0
      %377 = vmatprep.subr.bf16.mxu0 0
      %378 = vmatpush1.bf16.msra.mxu0 0
      %379 = vmatprep.subr.bf16.mxu0 0
      %380 = vmatpush1.bf16.msra.mxu0 0
      %381 = vmatprep.mubr.bf16.mxu0 0
      %382 = vmatmul.mubr.bf16.gmra.mrb[0].mxu0 %v344
      %v383 = vpop.f32.mrb[0].mxu0
      %v384 = vadd.f32 0.0, %v383
      %v385 = vpop.f32.mrb[0].mxu0
      %v386 = vpop.f32.mrb[0].mxu0
      %v387 = vpop.f32.mrb[0].mxu0
      %388 = vdwg.mxu0
      %389 = vrot.lane.b32.xlu0 %v158, 112
      %v390 = vpop.permute.xlu0 %389
      %391 = vrot.lane.b32.xlu0 %v158, 80
      %v392 = vpop.permute.xlu0 %391
      %v394 = vsel %vm161, %v390, 0
      %v397 = vsel %vm161, %v392, 0
      %399 = vmatprep.subr.bf16.mxu0 0
      %400 = vmatpush1.bf16.xpose.msra.mxu0 %v397
      %401 = vmatprep.subr.bf16.mxu0 0
      %402 = vmatpush1.bf16.xpose.msra.mxu0 0
      %403 = vmatprep.subr.bf16.mxu0 0
      %404 = vmatpush1.bf16.xpose.msra.mxu0 0
      %405 = vmatprep.subr.bf16.mxu0 0
      %406 = vmatpush1.bf16.xpose.msra.mxu0 0
      %407 = vmatprep.subr.bf16.mxu0 0
      %408 = vmatpush1.bf16.xpose.msra.mxu0 0
      %409 = vmatprep.subr.bf16.mxu0 0
      %410 = vmatpush1.bf16.xpose.msra.mxu0 0
      %411 = vmatprep.subr.bf16.mxu0 0
      %412 = vmatpush1.bf16.xpose.msra.mxu0 0
      %413 = vmatprep.subr.bf16.mxu0 0
      %414 = vmatpush1.bf16.xpose.msra.mxu0 0
      %415 = vmatprep.subr.bf16.mxu0 0
      %416 = vmatpush1.bf16.xpose.msra.mxu0 0
      %417 = vmatprep.subr.bf16.mxu0 0
      %418 = vmatpush1.bf16.xpose.msra.mxu0 0
      %419 = vmatprep.subr.bf16.mxu0 0
      %420 = vmatpush1.bf16.xpose.msra.mxu0 0
      %421 = vmatprep.subr.bf16.mxu0 0
      %422 = vmatpush1.bf16.xpose.msra.mxu0 0
      %423 = vmatprep.subr.bf16.mxu0 0
      %424 = vmatpush1.bf16.xpose.msra.mxu0 0
      %425 = vmatprep.subr.bf16.mxu0 0
      %426 = vmatpush1.bf16.xpose.msra.mxu0 0
      %427 = vmatprep.subr.bf16.mxu0 0
      %428 = vmatpush1.bf16.xpose.msra.mxu0 0
      %429 = vmatprep.subr.bf16.mxu0 0
      %430 = vmatpush1.bf16.xpose.msra.mxu0 0
      %431 = vmatprep.mubr.bf16.mxu0 0
      %432 = vmatmul.mubr.bf16.gmra.mrb[0].mxu0 %v394
      %v433 = vpop.f32.mrb[0].mxu0
      %v434 = vadd.f32 0.0, %v433
      %v435 = vpop.f32.mrb[0].mxu0
      %v436 = vpop.f32.mrb[0].mxu0
      %v437 = vpop.f32.mrb[0].mxu0
      %438 = vdwg.mxu0
      %v439 = vmul.f32 %v434, 0.35355338
      %v440 = vadd.f32 %v439, %v213
      %v441 = vsel %vm161, %v440, -inf
      %442 = vmax.xlane.f32.xlu0 %v441
      %v443 = vpop.xlane.xlu0 %442
      %v444 = vsub.f32 %v440, %v443
      %v445 = vmul.f32 %v444, 1.442695
      %v446 = vpow.pop %v445
      %v447 = vsel %vm161, %v446, 0.0
      %448 = vadd.xlane.f32.xlu0 %v447
      %v449 = vpop.xlane.xlu0 %448
      %v450 = vrcp.pop %v449
      %v451 = vmul.f32 %v446, %v450
      %v452 = vpack.c.bf16 %v451, %v451
      %453 = vrot.lane.b32.xlu0 %v158, 48
      %v454 = vpop.permute.xlu0 %453
      %v456 = vsel %vm161, %v452, 0
      %v459 = vsel %vm233, %v454, 0
      %461 = vmatprep.subr.bf16.mxu0 0
      %462 = vmatpush1.bf16.msra.mxu0 %v459
      %463 = vmatprep.subr.bf16.mxu0 0
      %464 = vmatpush1.bf16.msra.mxu0 0
      %465 = vmatprep.subr.bf16.mxu0 0
      %466 = vmatpush1.bf16.msra.mxu0 0
      %467 = vmatprep.subr.bf16.mxu0 0
      %468 = vmatpush1.bf16.msra.mxu0 0
      %469 = vmatprep.subr.bf16.mxu0 0
      %470 = vmatpush1.bf16.msra.mxu0 0
      %471 = vmatprep.subr.bf16.mxu0 0
      %472 = vmatpush1.bf16.msra.mxu0 0
      %473 = vmatprep.subr.bf16.mxu0 0
      %474 = vmatpush1.bf16.msra.mxu0 0
      %475 = vmatprep.subr.bf16.mxu0 0
      %476 = vmatpush1.bf16.msra.mxu0 0
      %477 = vmatprep.subr.bf16.mxu0 0
      %478 = vmatpush1.bf16.msra.mxu0 0
      %479 = vmatprep.subr.bf16.mxu0 0
      %480 = vmatpush1.bf16.msra.mxu0 0
      %481 = vmatprep.subr.bf16.mxu0 0
      %482 = vmatpush1.bf16.msra.mxu0 0
      %483 = vmatprep.subr.bf16.mxu0 0
      %484 = vmatpush1.bf16.msra.mxu0 0
      %485 = vmatprep.subr.bf16.mxu0 0
      %486 = vmatpush1.bf16.msra.mxu0 0
      %487 = vmatprep.subr.bf16.mxu0 0
      %488 = vmatpush1.bf16.msra.mxu0 0
      %489 = vmatprep.subr.bf16.mxu0 0
      %490 = vmatpush1.bf16.msra.mxu0 0
      %491 = vmatprep.subr.bf16.mxu0 0
      %492 = vmatpush1.bf16.msra.mxu0 0
      %493 = vmatprep.mubr.bf16.mxu0 0
      %494 = vmatmul.mubr.bf16.gmra.mrb[0].mxu0 %v456
      %v495 = vpop.f32.mrb[0].mxu0
      %v496 = vadd.f32 0.0, %v495
      %v497 = vpop.f32.mrb[0].mxu0
      %v498 = vpop.f32.mrb[0].mxu0
      %v499 = vpop.f32.mrb[0].mxu0
      %500 = vdwg.mxu0
      %501 = vrot.lane.b32.xlu0 %v158, 104
      %v502 = vpop.permute.xlu0 %501
      %503 = vrot.lane.b32.xlu0 %v158, 72
      %v504 = vpop.permute.xlu0 %503
      %v506 = vsel %vm161, %v502, 0
      %v509 = vsel %vm161, %v504, 0
      %511 = vmatprep.subr.bf16.mxu0 0
      %512 = vmatpush1.bf16.xpose.msra.mxu0 %v509
      %513 = vmatprep.subr.bf16.mxu0 0
      %514 = vmatpush1.bf16.xpose.msra.mxu0 0
      %515 = vmatprep.subr.bf16.mxu0 0
      %516 = vmatpush1.bf16.xpose.msra.mxu0 0
      %517 = vmatprep.subr.bf16.mxu0 0
      %518 = vmatpush1.bf16.xpose.msra.mxu0 0
      %519 = vmatprep.subr.bf16.mxu0 0
      %520 = vmatpush1.bf16.xpose.msra.mxu0 0
      %521 = vmatprep.subr.bf16.mxu0 0
      %522 = vmatpush1.bf16.xpose.msra.mxu0 0
      %523 = vmatprep.subr.bf16.mxu0 0
      %524 = vmatpush1.bf16.xpose.msra.mxu0 0
      %525 = vmatprep.subr.bf16.mxu0 0
      %526 = vmatpush1.bf16.xpose.msra.mxu0 0
      %527 = vmatprep.subr.bf16.mxu0 0
      %528 = vmatpush1.bf16.xpose.msra.mxu0 0
      %529 = vmatprep.subr.bf16.mxu0 0
      %530 = vmatpush1.bf16.xpose.msra.mxu0 0
      %531 = vmatprep.subr.bf16.mxu0 0
      %532 = vmatpush1.bf16.xpose.msra.mxu0 0
      %533 = vmatprep.subr.bf16.mxu0 0
      %534 = vmatpush1.bf16.xpose.msra.mxu0 0
      %535 = vmatprep.subr.bf16.mxu0 0
      %536 = vmatpush1.bf16.xpose.msra.mxu0 0
      %537 = vmatprep.subr.bf16.mxu0 0
      %538 = vmatpush1.bf16.xpose.msra.mxu0 0
      %539 = vmatprep.subr.bf16.mxu0 0
      %540 = vmatpush1.bf16.xpose.msra.mxu0 0
      %541 = vmatprep.subr.bf16.mxu0 0
      %542 = vmatpush1.bf16.xpose.msra.mxu0 0
      %543 = vmatprep.mubr.bf16.mxu0 0
      %544 = vmatmul.mubr.bf16.gmra.mrb[0].mxu0 %v506
      %v545 = vpop.f32.mrb[0].mxu0
      %v546 = vadd.f32 0.0, %v545
      %v547 = vpop.f32.mrb[0].mxu0
      %v548 = vpop.f32.mrb[0].mxu0
      %v549 = vpop.f32.mrb[0].mxu0
      %550 = vdwg.mxu0
      %v551 = vmul.f32 %v546, 0.35355338
      %v552 = vadd.f32 %v551, %v213
      %v553 = vsel %vm161, %v552, -inf
      %554 = vmax.xlane.f32.xlu0 %v553
      %v555 = vpop.xlane.xlu0 %554
      %v556 = vsub.f32 %v552, %v555
      %v557 = vmul.f32 %v556, 1.442695
      %v558 = vpow.pop %v557
      %v559 = vsel %vm161, %v558, 0.0
      %560 = vadd.xlane.f32.xlu0 %v559
      %v561 = vpop.xlane.xlu0 %560
      %v562 = vrcp.pop %v561
      %v563 = vmul.f32 %v558, %v562
      %v564 = vpack.c.bf16 %v563, %v563
      %565 = vrot.lane.b32.xlu0 %v158, 40
      %v566 = vpop.permute.xlu0 %565
      %v568 = vsel %vm161, %v564, 0
      %v571 = vsel %vm233, %v566, 0
      %573 = vmatprep.subr.bf16.mxu0 0
      %574 = vmatpush1.bf16.msra.mxu0 %v571
      %575 = vmatprep.subr.bf16.mxu0 0
      %576 = vmatpush1.bf16.msra.mxu0 0
      %577 = vmatprep.subr.bf16.mxu0 0
      %578 = vmatpush1.bf16.msra.mxu0 0
      %579 = vmatprep.subr.bf16.mxu0 0
      %580 = vmatpush1.bf16.msra.mxu0 0
      %581 = vmatprep.subr.bf16.mxu0 0
      %582 = vmatpush1.bf16.msra.mxu0 0
      %583 = vmatprep.subr.bf16.mxu0 0
      %584 = vmatpush1.bf16.msra.mxu0 0
      %585 = vmatprep.subr.bf16.mxu0 0
      %586 = vmatpush1.bf16.msra.mxu0 0
      %587 = vmatprep.subr.bf16.mxu0 0
      %588 = vmatpush1.bf16.msra.mxu0 0
      %589 = vmatprep.subr.bf16.mxu0 0
      %590 = vmatpush1.bf16.msra.mxu0 0
      %591 = vmatprep.subr.bf16.mxu0 0
      %592 = vmatpush1.bf16.msra.mxu0 0
      %593 = vmatprep.subr.bf16.mxu0 0
      %594 = vmatpush1.bf16.msra.mxu0 0
      %595 = vmatprep.subr.bf16.mxu0 0
      %596 = vmatpush1.bf16.msra.mxu0 0
      %597 = vmatprep.subr.bf16.mxu0 0
      %598 = vmatpush1.bf16.msra.mxu0 0
      %599 = vmatprep.subr.bf16.mxu0 0
      %600 = vmatpush1.bf16.msra.mxu0 0
      %601 = vmatprep.subr.bf16.mxu0 0
      %602 = vmatpush1.bf16.msra.mxu0 0
      %603 = vmatprep.subr.bf16.mxu0 0
      %604 = vmatpush1.bf16.msra.mxu0 0
      %605 = vmatprep.mubr.bf16.mxu0 0
      %606 = vmatmul.mubr.bf16.gmra.mrb[0].mxu0 %v568
      %v607 = vpop.f32.mrb[0].mxu0
      %v608 = vadd.f32 0.0, %v607
      %v609 = vpop.f32.mrb[0].mxu0
      %v610 = vpop.f32.mrb[0].mxu0
      %v611 = vpop.f32.mrb[0].mxu0
      %612 = vdwg.mxu0
      %614 = vrot.lane.b32.xlu0 %v384, 8
      %v615 = vpop.permute.xlu0 %614
      %618 = vrot.lane.b32.xlu0 %v496, 16
      %v619 = vpop.permute.xlu0 %618
      %622 = vrot.lane.b32.xlu0 %v608, 24
      %v623 = vpop.permute.xlu0 %622
      %v625 = vsel %vm161, %v272, %v615
      %vm626 = vcmask 130048
      %v627 = vsel %vm626, %v625, %v619
      %vm628 = vcmask 195584
      %v629 = vsel %vm628, %v627, %v623
      %v630 = vpack.c.bf16 %v629, %v629
      %vm631 = vcmask 257024
      %632 = vst.msk [vmem:[%s152] sm:$0xf] %vm631, %v630
      %p633 = scmp.lt.s32.totalorder %s13, 1
      %s634 = scalar_select %p633, %s13, 1
      %s635 = smul.addr %s634, 4
      %s636 = scalar_lea.vmem %s2, %s635
      // Predicated region
      $region29: #{bert_base_cased_forward.14} parent=27 // pred_check
        %p637 = pneg %p83
      $region30: #{bert_base_cased_forward.14} parent=27 // pred_check_branch
        %639 = sbr.rel (%p637) target = $region32
      $region31: #{bert_base_cased_forward.14} parent=27 // pred_region
        _
      $region32: #{bert_base_cased_forward.14} parent=27 // pred_fallthru
        _
    $region28: #{bert_base_cased_forward.14} parent=5 // pred_fallthru
      _
    %p640 = scmp.le.s32.totalorder 2, %s8
    // Predicated region
    $region33: #{bert_base_cased_forward.14} parent=5 // pred_check
      %p641 = pneg %p640
    $region34: #{bert_base_cased_forward.14} parent=5 // pred_check_branch
      %643 = sbr.rel (%p641) target = $region36
    $region35: #{bert_base_cased_forward.14} parent=5 // pred_region
      %s644 = ssub.s32 %s8, 2
      // Predicated region
      $region37: #{bert_base_cased_forward.14} parent=35 // pred_check
        %p645 = pneg %p89
      $region38: #{bert_base_cased_forward.14} parent=35 // pred_check_branch
        %647 = sbr.rel (%p645) target = $region40
      $region39: #{bert_base_cased_forward.14} parent=35 // pred_region
        %p648 = scmp.lt.s32.totalorder %s14, 1
        %s649 = scalar_select %p648, %s14, 1
        %s650 = smul.addr %s649, 4
        %s651 = scalar_lea.vmem %s2, %s650
      $region40: #{bert_base_cased_forward.14} parent=35 // pred_fallthru
        _
    $region36: #{bert_base_cased_forward.14} parent=5 // pred_fallthru
      _
  $region6: #{bert_base_cased_forward.14} parent=0 // loop_footer
    %s12 = sadd.s32 1, %s8
  $region7: #{bert_base_cased_forward.14} parent=0 // loop_footer_branch
    %7 = sbr.rel target = $region3
  $region8: #{bert_base_cased_forward.14} parent=0 // loop_exit
    _

// kernel: bert_base_cased_forward.16
$region0: #{bert_base_cased_forward.16}
  #allocation0 [shape = 'u32[]', space=smem, size = 0x4, offset = 0x4, fixed_abs, tag = 'smem constant byte address 0x4 - core index']
  #allocation1 [shape = 'u32[144,128]{1,0:T(1,128)}', space=vmem, size = 0x12000, scoped, tag = 'internal scratch']
  #allocation2 [shape = 'f32[16,64]{1,0:T(8,128)}', space=vmem, size = 0x2000, scoped, tag = 'scratch operand']
  %s0 = inlined_call_operand.vmem [shape: bf16[16,32], index: 0, kind: input, shape index: {}]
  %s1 = inlined_call_operand.vmem [shape: bf16[32,64], index: 1, kind: input, shape index: {}]
  %s2 = inlined_call_operand.vmem [shape: f32[1,64], index: 2, kind: input, shape index: {}]
  %s3 = inlined_call_operand.vmem [shape: bf16[16,64], index: 3, kind: output, shape index: {}]
  %s4 = sld [smem:[#allocation0]]
  $region30: #{bert_base_cased_forward.16} parent=0
    _
  %s6 = ssub.s32 1, %s4
  %s7 = scalar_select 0, %s6, %s4
  // Predicated region
  $region2: #{bert_base_cased_forward.16} parent=0 // pred_check
    _
  $region3: #{bert_base_cased_forward.16} parent=0 // pred_check_branch
    %9 = sbr.rel (0) target = $region5
  $region4: #{bert_base_cased_forward.16} parent=0 // pred_region
    _
  $region5: #{bert_base_cased_forward.16} parent=0 // pred_fallthru
    _
  // Predicated region
  $region6: #{bert_base_cased_forward.16} parent=0 // pred_check
    _
  $region7: #{bert_base_cased_forward.16} parent=0 // pred_check_branch
    %11 = sbr.rel (0) target = $region9
  $region8: #{bert_base_cased_forward.16} parent=0 // pred_region
    _
  $region9: #{bert_base_cased_forward.16} parent=0 // pred_fallthru
    _
  // Predicated region
  $region10: #{bert_base_cased_forward.16} parent=0 // pred_check
    _
  $region11: #{bert_base_cased_forward.16} parent=0 // pred_check_branch
    %13 = sbr.rel (0) target = $region13
  $region12: #{bert_base_cased_forward.16} parent=0 // pred_region
    _
  $region13: #{bert_base_cased_forward.16} parent=0 // pred_fallthru
    _
  %p15 = scmp.eq.s32.totalorder 0, 0
  // Predicated region
  $region14: #{bert_base_cased_forward.16} parent=0 // pred_check
    %p16 = pneg %p15
  $region15: #{bert_base_cased_forward.16} parent=0 // pred_check_branch
    %18 = sbr.rel (%p16) target = $region17
  $region16: #{bert_base_cased_forward.16} parent=0 // pred_region
    %vm19 = vcmask 523264
    %20 = vst.msk [vmem:[#allocation2] sm:$0xff] %vm19, 0.0
    %21 = vst.msk [vmem:[#allocation2 + $0x8] sm:$0xff] %vm19, 0.0
  $region17: #{bert_base_cased_forward.16} parent=0 // pred_fallthru
    _
  %v22 = vld [vmem:[#allocation2] sm:$0xff]
  %v23 = vld [vmem:[#allocation2 + $0x8] sm:$0xff]
  %v24 = vld [vmem:[%s0] sm:$0xf]
  %v25 = vld [vmem:[%s0 + $0x4] sm:$0xf]
  %v26 = vld [vmem:[%s1] sm:$0xf]
  %v27 = vld [vmem:[%s1 + $0x4] sm:$0xf]
  %v28 = vld [vmem:[%s1 + $0x8] sm:$0xf]
  %v29 = vld [vmem:[%s1 + $0xc] sm:$0xf]
  %v32 = vunpack.c.l.b16 %v24
  %v33 = vunpack.c.l.b16 %v25
  %v34 = vpack.c.b16 %v33, %v32
  %v39 = vunpack.c.l.b16 %v26
  %v40 = vunpack.c.l.b16 %v27
  %v41 = vunpack.c.l.b16 %v28
  %v42 = vunpack.c.l.b16 %v29
  %v43 = vpack.c.b16 %v40, %v39
  %v44 = vpack.c.b16 %v42, %v41
  %vm47 = vcmask 261120
  %v49 = vsel %vm47, %v34, 0
  %51 = vmatprep.subr.bf16.mxu0 0
  %52 = vmatpush1.bf16.msra.mxu0 %v43
  %53 = vmatprep.subr.bf16.mxu0 0
  %54 = vmatpush1.bf16.msra.mxu0 %v44
  %55 = vmatprep.subr.bf16.mxu0 0
  %56 = vmatpush1.bf16.msra.mxu0 0
  %57 = vmatprep.subr.bf16.mxu0 0
  %58 = vmatpush1.bf16.msra.mxu0 0
  %59 = vmatprep.subr.bf16.mxu0 0
  %60 = vmatpush1.bf16.msra.mxu0 0
  %61 = vmatprep.subr.bf16.mxu0 0
  %62 = vmatpush1.bf16.msra.mxu0 0
  %63 = vmatprep.subr.bf16.mxu0 0
  %64 = vmatpush1.bf16.msra.mxu0 0
  %65 = vmatprep.subr.bf16.mxu0 0
  %66 = vmatpush1.bf16.msra.mxu0 0
  %67 = vmatprep.subr.bf16.mxu0 0
  %68 = vmatpush1.bf16.msra.mxu0 0
  %69 = vmatprep.subr.bf16.mxu0 0
  %70 = vmatpush1.bf16.msra.mxu0 0
  %71 = vmatprep.subr.bf16.mxu0 0
  %72 = vmatpush1.bf16.msra.mxu0 0
  %73 = vmatprep.subr.bf16.mxu0 0
  %74 = vmatpush1.bf16.msra.mxu0 0
  %75 = vmatprep.subr.bf16.mxu0 0
  %76 = vmatpush1.bf16.msra.mxu0 0
  %77 = vmatprep.subr.bf16.mxu0 0
  %78 = vmatpush1.bf16.msra.mxu0 0
  %79 = vmatprep.subr.bf16.mxu0 0
  %80 = vmatpush1.bf16.msra.mxu0 0
  %81 = vmatprep.subr.bf16.mxu0 0
  %82 = vmatpush1.bf16.msra.mxu0 0
  %83 = vmatprep.mubr.bf16.mxu0 0
  %84 = vmatmul.mubr.bf16.gmra.mrb[0].mxu0 %v49
  %v85 = vpop.f32.mrb[0].mxu0
  %v86 = vadd.f32 0.0, %v85
  %v87 = vpop.f32.mrb[0].mxu0
  %v88 = vpop.f32.mrb[0].mxu0
  %v89 = vadd.f32 0.0, %v88
  %v90 = vpop.f32.mrb[0].mxu0
  %91 = vdwg.mxu0
  %v92 = vadd.f32 %v22, %v86
  %v93 = vadd.f32 %v23, %v89
  %vm94 = vcmask 523264
  %95 = vst.msk [vmem:[#allocation2] sm:$0xff] %vm94, %v92
  %96 = vst.msk [vmem:[#allocation2 + $0x8] sm:$0xff] %vm94, %v93
  // Predicated region
  $region18: #{bert_base_cased_forward.16} parent=0 // pred_check
    %p97 = pneg %p15
  $region19: #{bert_base_cased_forward.16} parent=0 // pred_check_branch
    %99 = sbr.rel (%p97) target = $region21
  $region20: #{bert_base_cased_forward.16} parent=0 // pred_region
    %v100 = vld [vmem:[#allocation2] sm:$0xff]
    %v101 = vld [vmem:[#allocation2 + $0x8] sm:$0xff]
    %v102 = vld [vmem:[%s2] sm:$0x1]
    %v104 = vlaneseq
    %v105 = vshrl.u32 %v104, 7
    %v106 = vsub.s32 0, %v105
    %v107 = vrot.slane %v102, %v106
    %v109 = vadd.f32 %v100, %v107
    %v110 = vadd.f32 %v101, %v107
    %v111 = vmul.f32 %v109, 0.5
    %v112 = vmul.f32 %v110, 0.5
    %v113 = vmul.f32 %v109, 0.044715
    %v114 = vmul.f32 %v110, 0.044715
    %v115 = vmul.f32 %v113, %v109
    %v116 = vmul.f32 %v114, %v110
    %v117 = vmul.f32 %v115, %v109
    %v118 = vmul.f32 %v116, %v110
    %v119 = vadd.f32 %v109, %v117
    %v120 = vadd.f32 %v110, %v118
    %v121 = vmul.f32 %v119, 0.7978846
    %v122 = vmul.f32 %v120, 0.7978846
    %v123 = vtanh.pop %v121
    %v124 = vtanh.pop %v122
    %v125 = vadd.f32 %v123, 1.0
    %v126 = vadd.f32 %v124, 1.0
    %v127 = vmul.f32 %v111, %v125
    %v128 = vmul.f32 %v112, %v126
    %v129 = vpack.c.bf16 %v128, %v127
    %v131 = vunpack.c.l.b16 %v129
    %v132 = vunpack.c.h.b16 %v129
    %v133 = vpack.c.b16 %v131, %v131
    %v134 = vpack.c.b16 %v132, %v132
    %vm137 = vcmask 519168
    %138 = vst.msk [vmem:[%s3] sm:$0xf] %vm137, %v133
    %139 = vst.msk [vmem:[%s3 + $0x4] sm:$0xf] %vm137, %v134
  $region21: #{bert_base_cased_forward.16} parent=0 // pred_fallthru
    _
  // Predicated region
  $region22: #{bert_base_cased_forward.16} parent=0 // pred_check
    _
  $region23: #{bert_base_cased_forward.16} parent=0 // pred_check_branch
    %141 = sbr.rel (0) target = $region25
  $region24: #{bert_base_cased_forward.16} parent=0 // pred_region
    _
  $region25: #{bert_base_cased_forward.16} parent=0 // pred_fallthru
    _
  // Predicated region
  $region26: #{bert_base_cased_forward.16} parent=0 // pred_check
    _
  $region27: #{bert_base_cased_forward.16} parent=0 // pred_check_branch
    %143 = sbr.rel (0) target = $region29
  $region28: #{bert_base_cased_forward.16} parent=0 // pred_region
    _
  $region29: #{bert_base_cased_forward.16} parent=0 // pred_fallthru
    _

// kernel: bert_base_cased_forward.17
$region0: #{bert_base_cased_forward.17}
  #allocation0 [shape = 'u32[]', space=smem, size = 0x4, offset = 0x4, fixed_abs, tag = 'smem constant byte address 0x4 - core index']
  #allocation1 [shape = 'u32[144,128]{1,0:T(1,128)}', space=vmem, size = 0x12000, scoped, tag = 'internal scratch']
  #allocation2 [shape = 'f32[16,32]{1,0:T(8,128)}', space=vmem, size = 0x2000, scoped, tag = 'scratch operand']
  %s0 = inlined_call_operand.vmem [shape: bf16[16,64], index: 0, kind: input, shape index: {}]
  %s1 = inlined_call_operand.vmem [shape: bf16[64,32], index: 1, kind: input, shape index: {}]
  %s2 = inlined_call_operand.vmem [shape: f32[1,32], index: 2, kind: input, shape index: {}]
  %s3 = inlined_call_operand.vmem [shape: bf16[16,32], index: 3, kind: input, shape index: {}]
  %s4 = inlined_call_operand.vmem [shape: f32[1,32], index: 4, kind: input, shape index: {}]
  %s5 = inlined_call_operand.vmem [shape: f32[1,32], index: 5, kind: input, shape index: {}]
  %s6 = inlined_call_operand.vmem [shape: bf16[16,32], index: 6, kind: output, shape index: {}]
  %s7 = sld [smem:[#allocation0]]
  $region42: #{bert_base_cased_forward.17} parent=0
    _
  %s9 = ssub.s32 1, %s7
  %s10 = scalar_select 0, %s9, %s7
  // Predicated region
  $region2: #{bert_base_cased_forward.17} parent=0 // pred_check
    _
  $region3: #{bert_base_cased_forward.17} parent=0 // pred_check_branch
    %12 = sbr.rel (0) target = $region5
  $region4: #{bert_base_cased_forward.17} parent=0 // pred_region
    _
  $region5: #{bert_base_cased_forward.17} parent=0 // pred_fallthru
    _
  // Predicated region
  $region6: #{bert_base_cased_forward.17} parent=0 // pred_check
    _
  $region7: #{bert_base_cased_forward.17} parent=0 // pred_check_branch
    %14 = sbr.rel (0) target = $region9
  $region8: #{bert_base_cased_forward.17} parent=0 // pred_region
    _
  $region9: #{bert_base_cased_forward.17} parent=0 // pred_fallthru
    _
  // Predicated region
  $region10: #{bert_base_cased_forward.17} parent=0 // pred_check
    _
  $region11: #{bert_base_cased_forward.17} parent=0 // pred_check_branch
    %16 = sbr.rel (0) target = $region13
  $region12: #{bert_base_cased_forward.17} parent=0 // pred_region
    _
  $region13: #{bert_base_cased_forward.17} parent=0 // pred_fallthru
    _
  // Predicated region
  $region14: #{bert_base_cased_forward.17} parent=0 // pred_check
    _
  $region15: #{bert_base_cased_forward.17} parent=0 // pred_check_branch
    %18 = sbr.rel (0) target = $region17
  $region16: #{bert_base_cased_forward.17} parent=0 // pred_region
    _
  $region17: #{bert_base_cased_forward.17} parent=0 // pred_fallthru
    _
  // Predicated region
  $region18: #{bert_base_cased_forward.17} parent=0 // pred_check
    _
  $region19: #{bert_base_cased_forward.17} parent=0 // pred_check_branch
    %20 = sbr.rel (0) target = $region21
  $region20: #{bert_base_cased_forward.17} parent=0 // pred_region
    _
  $region21: #{bert_base_cased_forward.17} parent=0 // pred_fallthru
    _
  // Predicated region
  $region22: #{bert_base_cased_forward.17} parent=0 // pred_check
    _
  $region23: #{bert_base_cased_forward.17} parent=0 // pred_check_branch
    %22 = sbr.rel (0) target = $region25
  $region24: #{bert_base_cased_forward.17} parent=0 // pred_region
    _
  $region25: #{bert_base_cased_forward.17} parent=0 // pred_fallthru
    _
  %p24 = scmp.eq.s32.totalorder 0, 0
  // Predicated region
  $region26: #{bert_base_cased_forward.17} parent=0 // pred_check
    %p25 = pneg %p24
  $region27: #{bert_base_cased_forward.17} parent=0 // pred_check_branch
    %27 = sbr.rel (%p25) target = $region29
  $region28: #{bert_base_cased_forward.17} parent=0 // pred_region
    %vm28 = vcmask 261120
    %29 = vst.msk [vmem:[#allocation2] sm:$0xff] %vm28, 0.0
    %30 = vst.msk [vmem:[#allocation2 + $0x8] sm:$0xff] %vm28, 0.0
  $region29: #{bert_base_cased_forward.17} parent=0 // pred_fallthru
    _
  %v31 = vld [vmem:[#allocation2] sm:$0xff]
  %v32 = vld [vmem:[#allocation2 + $0x8] sm:$0xff]
  %v33 = vld [vmem:[%s0] sm:$0xf]
  %v34 = vld [vmem:[%s0 + $0x4] sm:$0xf]
  %v35 = vld [vmem:[%s1] sm:$0xf]
  %v36 = vld [vmem:[%s1 + $0x4] sm:$0xf]
  %v37 = vld [vmem:[%s1 + $0x8] sm:$0xf]
  %v38 = vld [vmem:[%s1 + $0xc] sm:$0xf]
  %v39 = vld [vmem:[%s1 + $0x10] sm:$0xf]
  %v40 = vld [vmem:[%s1 + $0x14] sm:$0xf]
  %v41 = vld [vmem:[%s1 + $0x18] sm:$0xf]
  %v42 = vld [vmem:[%s1 + $0x1c] sm:$0xf]
  %v45 = vunpack.c.l.b16 %v33
  %v46 = vunpack.c.l.b16 %v34
  %v47 = vpack.c.b16 %v46, %v45
  %v56 = vunpack.c.l.b16 %v35
  %v57 = vunpack.c.l.b16 %v36
  %v58 = vunpack.c.l.b16 %v37
  %v59 = vunpack.c.l.b16 %v38
  %v60 = vunpack.c.l.b16 %v39
  %v61 = vunpack.c.l.b16 %v40
  %v62 = vunpack.c.l.b16 %v41
  %v63 = vunpack.c.l.b16 %v42
  %v64 = vpack.c.b16 %v57, %v56
  %v65 = vpack.c.b16 %v59, %v58
  %v66 = vpack.c.b16 %v61, %v60
  %v67 = vpack.c.b16 %v63, %v62
  %vm72 = vcmask 523264
  %v74 = vsel %vm72, %v47, 0
  %76 = vmatprep.subr.bf16.mxu0 0
  %77 = vmatpush1.bf16.msra.mxu0 %v64
  %78 = vmatprep.subr.bf16.mxu0 0
  %79 = vmatpush1.bf16.msra.mxu0 %v65
  %80 = vmatprep.subr.bf16.mxu0 0
  %81 = vmatpush1.bf16.msra.mxu0 %v66
  %82 = vmatprep.subr.bf16.mxu0 0
  %83 = vmatpush1.bf16.msra.mxu0 %v67
  %84 = vmatprep.subr.bf16.mxu0 0
  %85 = vmatpush1.bf16.msra.mxu0 0
  %86 = vmatprep.subr.bf16.mxu0 0
  %87 = vmatpush1.bf16.msra.mxu0 0
  %88 = vmatprep.subr.bf16.mxu0 0
  %89 = vmatpush1.bf16.msra.mxu0 0
  %90 = vmatprep.subr.bf16.mxu0 0
  %91 = vmatpush1.bf16.msra.mxu0 0
  %92 = vmatprep.subr.bf16.mxu0 0
  %93 = vmatpush1.bf16.msra.mxu0 0
  %94 = vmatprep.subr.bf16.mxu0 0
  %95 = vmatpush1.bf16.msra.mxu0 0
  %96 = vmatprep.subr.bf16.mxu0 0
  %97 = vmatpush1.bf16.msra.mxu0 0
  %98 = vmatprep.subr.bf16.mxu0 0
  %99 = vmatpush1.bf16.msra.mxu0 0
  %100 = vmatprep.subr.bf16.mxu0 0
  %101 = vmatpush1.bf16.msra.mxu0 0
  %102 = vmatprep.subr.bf16.mxu0 0
  %103 = vmatpush1.bf16.msra.mxu0 0
  %104 = vmatprep.subr.bf16.mxu0 0
  %105 = vmatpush1.bf16.msra.mxu0 0
  %106 = vmatprep.subr.bf16.mxu0 0
  %107 = vmatpush1.bf16.msra.mxu0 0
  %108 = vmatprep.mubr.bf16.mxu0 0
  %109 = vmatmul.mubr.bf16.gmra.mrb[0].mxu0 %v74
  %v110 = vpop.f32.mrb[0].mxu0
  %v111 = vadd.f32 0.0, %v110
  %v112 = vpop.f32.mrb[0].mxu0
  %v113 = vpop.f32.mrb[0].mxu0
  %v114 = vadd.f32 0.0, %v113
  %v115 = vpop.f32.mrb[0].mxu0
  %116 = vdwg.mxu0
  %v117 = vadd.f32 %v31, %v111
  %v118 = vadd.f32 %v32, %v114
  %vm119 = vcmask 261120
  %120 = vst.msk [vmem:[#allocation2] sm:$0xff] %vm119, %v117
  %121 = vst.msk [vmem:[#allocation2 + $0x8] sm:$0xff] %vm119, %v118
  // Predicated region
  $region30: #{bert_base_cased_forward.17} parent=0 // pred_check
    %p122 = pneg %p24
  $region31: #{bert_base_cased_forward.17} parent=0 // pred_check_branch
    %124 = sbr.rel (%p122) target = $region33
  $region32: #{bert_base_cased_forward.17} parent=0 // pred_region
    %v125 = vld [vmem:[#allocation2] sm:$0xff]
    %v126 = vld [vmem:[#allocation2 + $0x8] sm:$0xff]
    %v127 = vld [vmem:[%s2] sm:$0x1]
    %v129 = vlaneseq
    %v130 = vshrl.u32 %v129, 7
    %v131 = vsub.s32 0, %v130
    %v132 = vrot.slane %v127, %v131
    %v134 = vadd.f32 %v125, %v132
    %v135 = vadd.f32 %v126, %v132
    %v136 = vld [vmem:[%s3] sm:$0xf]
    %v137 = vld [vmem:[%s3 + $0x4] sm:$0xf]
    %v138 = vunpack.c.l.bf16 %v136
    %v139 = vunpack.c.l.bf16 %v137
    %v140 = vadd.f32 %v134, %v138
    %v141 = vadd.f32 %v135, %v139
    %v142 = vsel %vm119, %v140, 0.0
    %143 = vadd.xlane.f32.xlu0 %v142
    %v144 = vpop.xlane.xlu0 %143
    %v145 = vsel %vm119, %v141, 0.0
    %146 = vadd.xlane.f32.xlu0 %v145
    %v147 = vpop.xlane.xlu0 %146
    %v148 = vrcp.pop 32.0
    %v149 = vmul.f32 %v144, %v148
    %v150 = vmul.f32 %v147, %v148
    %v151 = vsub.f32 %v140, %v149
    %v152 = vsub.f32 %v141, %v150
    %v153 = vmul.f32 %v151, %v151
    %v154 = vmul.f32 %v152, %v152
    %v155 = vsel %vm119, %v153, 0.0
    %156 = vadd.xlane.f32.xlu0 %v155
    %v157 = vpop.xlane.xlu0 %156
    %v158 = vsel %vm119, %v154, 0.0
    %159 = vadd.xlane.f32.xlu0 %v158
    %v160 = vpop.xlane.xlu0 %159
    %v161 = vmul.f32 %v157, %v148
    %v162 = vmul.f32 %v160, %v148
    %v163 = vadd.f32 %v161, 1e-12
    %v164 = vadd.f32 %v162, 1e-12
    %v165 = vrsqrt.pop %v163
    %v166 = vrsqrt.pop %v164
    %v167 = vmul.f32 %v151, %v165
    %v168 = vmul.f32 %v152, %v166
    %v169 = vld [vmem:[%s4] sm:$0x1]
    %v171 = vlaneseq
    %v172 = vshrl.u32 %v171, 7
    %v173 = vsub.s32 0, %v172
    %v174 = vrot.slane %v169, %v173
    %v176 = vmul.f32 %v167, %v174
    %v177 = vmul.f32 %v168, %v174
    %v178 = vld [vmem:[%s5] sm:$0x1]
    %v180 = vlaneseq
    %v181 = vshrl.u32 %v180, 7
    %v182 = vsub.s32 0, %v181
    %v183 = vrot.slane %v178, %v182
    %v185 = vadd.f32 %v176, %v183
    %v186 = vadd.f32 %v177, %v183
    %v187 = vpack.c.bf16 %v186, %v185
    %v189 = vunpack.c.l.b16 %v187
    %v190 = vunpack.c.h.b16 %v187
    %v191 = vpack.c.b16 %v189, %v189
    %v192 = vpack.c.b16 %v190, %v190
    %vm195 = vcmask 257024
    %196 = vst.msk [vmem:[%s6] sm:$0xf] %vm195, %v191
    %197 = vst.msk [vmem:[%s6 + $0x4] sm:$0xf] %vm195, %v192
  $region33: #{bert_base_cased_forward.17} parent=0 // pred_fallthru
    _
  // Predicated region
  $region34: #{bert_base_cased_forward.17} parent=0 // pred_check
    _
  $region35: #{bert_base_cased_forward.17} parent=0 // pred_check_branch
    %199 = sbr.rel (0) target = $region37
  $region36: #{bert_base_cased_forward.17} parent=0 // pred_region
    _
  $region37: #{bert_base_cased_forward.17} parent=0 // pred_fallthru
    _
  // Predicated region
  $region38: #{bert_base_cased_forward.17} parent=0 // pred_check
    _
  $region39: #{bert_base_cased_forward.17} parent=0 // pred_check_branch
    %201 = sbr.rel (0) target = $region41
  $region40: #{bert_base_cased_forward.17} parent=0 // pred_region
    _
  $region41: #{bert_base_cased_forward.17} parent=0 // pred_fallthru
    _

// kernel: bert_base_cased_forward.23
$region0: #{bert_base_cased_forward.23}
  #allocation0 [shape = 'u32[]', space=smem, size = 0x4, offset = 0x4, fixed_abs, tag = 'smem constant byte address 0x4 - core index']
  #allocation1 [shape = 'u32[144,128]{1,0:T(1,128)}', space=vmem, size = 0x12000, scoped, tag = 'internal scratch']
  %s0 = inlined_call_operand.vmem [shape: bf16[2,32], index: 0, kind: input, shape index: {}]
  %s1 = inlined_call_operand.vmem [shape: bf16[32,32], index: 1, kind: input, shape index: {}]
  %s2 = inlined_call_operand.vmem [shape: f32[1,32], index: 2, kind: input, shape index: {}]
  %s3 = inlined_call_operand.vmem [shape: bf16[32,3], index: 3, kind: input, shape index: {}]
  %s4 = inlined_call_operand.vmem [shape: f32[1,3], index: 4, kind: input, shape index: {}]
  %s5 = inlined_call_operand.hbm [shape: f32[2,3], index: 5, kind: output, shape index: {}]
  %s6 = sld [smem:[#allocation0]]
  $region30: #{bert_base_cased_forward.23} parent=0
    _
  %s8 = ssub.s32 1, %s6
  %s9 = scalar_select 0, %s8, %s6
  $region1: #{bert_base_cased_forward.23} parent=0
    #allocation2 [shape = 'u8[1024]{0}', space=vmem, size = 0x400, scoped, tag = 'output window, operand 0, single buffered']
    #allocation3 [shape = 's32[1]{0}', space=sflag, size = 0x4, scoped, tag = 'scoped memory for bert_base_cased_forward.23']
    %10 = vsyncpa [#allocation3], 0
    // Predicated region
    $region2: #{bert_base_cased_forward.23} parent=1 // pred_check
      _
    $region3: #{bert_base_cased_forward.23} parent=1 // pred_check_branch
      %12 = sbr.rel (0) target = $region5
    $region4: #{bert_base_cased_forward.23} parent=1 // pred_region
      _
    $region5: #{bert_base_cased_forward.23} parent=1 // pred_fallthru
      _
    // Predicated region
    $region6: #{bert_base_cased_forward.23} parent=1 // pred_check
      _
    $region7: #{bert_base_cased_forward.23} parent=1 // pred_check_branch
      %14 = sbr.rel (0) target = $region9
    $region8: #{bert_base_cased_forward.23} parent=1 // pred_region
      _
    $region9: #{bert_base_cased_forward.23} parent=1 // pred_fallthru
      _
    // Predicated region
    $region10: #{bert_base_cased_forward.23} parent=1 // pred_check
      _
    $region11: #{bert_base_cased_forward.23} parent=1 // pred_check_branch
      %16 = sbr.rel (0) target = $region13
    $region12: #{bert_base_cased_forward.23} parent=1 // pred_region
      _
    $region13: #{bert_base_cased_forward.23} parent=1 // pred_fallthru
      _
    // Predicated region
    $region14: #{bert_base_cased_forward.23} parent=1 // pred_check
      _
    $region15: #{bert_base_cased_forward.23} parent=1 // pred_check_branch
      %18 = sbr.rel (0) target = $region17
    $region16: #{bert_base_cased_forward.23} parent=1 // pred_region
      _
    $region17: #{bert_base_cased_forward.23} parent=1 // pred_fallthru
      _
    // Predicated region
    $region18: #{bert_base_cased_forward.23} parent=1 // pred_check
      _
    $region19: #{bert_base_cased_forward.23} parent=1 // pred_check_branch
      %20 = sbr.rel (0) target = $region21
    $region20: #{bert_base_cased_forward.23} parent=1 // pred_region
      _
    $region21: #{bert_base_cased_forward.23} parent=1 // pred_fallthru
      _
    %v22 = vld [vmem:[%s0] sm:$0x1]
    %v23 = vld [vmem:[%s1] sm:$0xf]
    %v24 = vld [vmem:[%s1 + $0x4] sm:$0xf]
    %v25 = vld [vmem:[%s1 + $0x8] sm:$0xf]
    %v26 = vld [vmem:[%s1 + $0xc] sm:$0xf]
    %v27 = vld [vmem:[%s2] sm:$0x1]
    %v29 = vlaneseq
    %v30 = vshrl.u32 %v29, 7
    %v31 = vsub.s32 0, %v30
    %v32 = vrot.slane %v27, %v31
    %v38 = vunpack.c.l.b16 %v23
    %v39 = vunpack.c.l.b16 %v24
    %v40 = vunpack.c.l.b16 %v25
    %v41 = vunpack.c.l.b16 %v26
    %v42 = vpack.c.b16 %v39, %v38
    %v43 = vpack.c.b16 %v41, %v40
    %vm46 = vcmask 261120
    %v48 = vsel %vm46, %v22, 0
    %50 = vmatprep.subr.bf16.mxu0 0
    %51 = vmatpush1.bf16.msra.mxu0 %v42
    %52 = vmatprep.subr.bf16.mxu0 0
    %53 = vmatpush1.bf16.msra.mxu0 %v43
    %54 = vmatprep.subr.bf16.mxu0 0
    %55 = vmatpush1.bf16.msra.mxu0 0
    %56 = vmatprep.subr.bf16.mxu0 0
    %57 = vmatpush1.bf16.msra.mxu0 0
    %58 = vmatprep.subr.bf16.mxu0 0
    %59 = vmatpush1.bf16.msra.mxu0 0
    %60 = vmatprep.subr.bf16.mxu0 0
    %61 = vmatpush1.bf16.msra.mxu0 0
    %62 = vmatprep.subr.bf16.mxu0 0
    %63 = vmatpush1.bf16.msra.mxu0 0
    %64 = vmatprep.subr.bf16.mxu0 0
    %65 = vmatpush1.bf16.msra.mxu0 0
    %66 = vmatprep.subr.bf16.mxu0 0
    %67 = vmatpush1.bf16.msra.mxu0 0
    %68 = vmatprep.subr.bf16.mxu0 0
    %69 = vmatpush1.bf16.msra.mxu0 0
    %70 = vmatprep.subr.bf16.mxu0 0
    %71 = vmatpush1.bf16.msra.mxu0 0
    %72 = vmatprep.subr.bf16.mxu0 0
    %73 = vmatpush1.bf16.msra.mxu0 0
    %74 = vmatprep.subr.bf16.mxu0 0
    %75 = vmatpush1.bf16.msra.mxu0 0
    %76 = vmatprep.subr.bf16.mxu0 0
    %77 = vmatpush1.bf16.msra.mxu0 0
    %78 = vmatprep.subr.bf16.mxu0 0
    %79 = vmatpush1.bf16.msra.mxu0 0
    %80 = vmatprep.subr.bf16.mxu0 0
    %81 = vmatpush1.bf16.msra.mxu0 0
    %82 = vmatprep.mubr.bf16.mxu0 0
    %83 = vmatmul.mubr.bf16.gmra.mrb[0].mxu0 %v48
    %v84 = vpop.f32.mrb[0].mxu0
    %v85 = vadd.f32 %v32, %v84
    %v86 = vpop.f32.mrb[0].mxu0
    %v87 = vpop.f32.mrb[0].mxu0
    %v88 = vpop.f32.mrb[0].mxu0
    %89 = vdwg.mxu0
    %v90 = vtanh.pop %v85
    %v91 = vpack.c.bf16 %v90, %v90
    %v92 = vld [vmem:[%s3] sm:$0xf]
    %v93 = vld [vmem:[%s3 + $0x4] sm:$0xf]
    %v94 = vld [vmem:[%s3 + $0x8] sm:$0xf]
    %v95 = vld [vmem:[%s3 + $0xc] sm:$0xf]
    %v96 = vld [vmem:[%s4] sm:$0x1]
    %v98 = vlaneseq
    %v99 = vshrl.u32 %v98, 7
    %v100 = vsub.s32 0, %v99
    %v101 = vrot.slane %v96, %v100
    %v107 = vunpack.c.l.b16 %v92
    %v108 = vunpack.c.l.b16 %v93
    %v109 = vunpack.c.l.b16 %v94
    %v110 = vunpack.c.l.b16 %v95
    %v111 = vpack.c.b16 %v108, %v107
    %v112 = vpack.c.b16 %v110, %v109
    %v116 = vsel %vm46, %v91, 0
    %118 = vmatprep.subr.bf16.mxu0 0
    %119 = vmatpush1.bf16.msra.mxu0 %v111
    %120 = vmatprep.subr.bf16.mxu0 0
    %121 = vmatpush1.bf16.msra.mxu0 %v112
    %122 = vmatprep.subr.bf16.mxu0 0
    %123 = vmatpush1.bf16.msra.mxu0 0
    %124 = vmatprep.subr.bf16.mxu0 0
    %125 = vmatpush1.bf16.msra.mxu0 0
    %126 = vmatprep.subr.bf16.mxu0 0
    %127 = vmatpush1.bf16.msra.mxu0 0
    %128 = vmatprep.subr.bf16.mxu0 0
    %129 = vmatpush1.bf16.msra.mxu0 0
    %130 = vmatprep.subr.bf16.mxu0 0
    %131 = vmatpush1.bf16.msra.mxu0 0
    %132 = vmatprep.subr.bf16.mxu0 0
    %133 = vmatpush1.bf16.msra.mxu0 0
    %134 = vmatprep.subr.bf16.mxu0 0
    %135 = vmatpush1.bf16.msra.mxu0 0
    %136 = vmatprep.subr.bf16.mxu0 0
    %137 = vmatpush1.bf16.msra.mxu0 0
    %138 = vmatprep.subr.bf16.mxu0 0
    %139 = vmatpush1.bf16.msra.mxu0 0
    %140 = vmatprep.subr.bf16.mxu0 0
    %141 = vmatpush1.bf16.msra.mxu0 0
    %142 = vmatprep.subr.bf16.mxu0 0
    %143 = vmatpush1.bf16.msra.mxu0 0
    %144 = vmatprep.subr.bf16.mxu0 0
    %145 = vmatpush1.bf16.msra.mxu0 0
    %146 = vmatprep.subr.bf16.mxu0 0
    %147 = vmatpush1.bf16.msra.mxu0 0
    %148 = vmatprep.subr.bf16.mxu0 0
    %149 = vmatpush1.bf16.msra.mxu0 0
    %150 = vmatprep.mubr.bf16.mxu0 0
    %151 = vmatmul.mubr.bf16.gmra.mrb[0].mxu0 %v116
    %v152 = vpop.f32.mrb[0].mxu0
    %v153 = vadd.f32 %v101, %v152
    %v154 = vpop.f32.mrb[0].mxu0
    %v155 = vpop.f32.mrb[0].mxu0
    %v156 = vpop.f32.mrb[0].mxu0
    %157 = vdwg.mxu0
    %vm158 = vcmask 17408
    %159 = vst.msk [vmem:[#allocation2] sm:$0x3] %vm158, %v153
    // Predicated region
    $region22: #{bert_base_cased_forward.23} parent=1 // pred_check
      _
    $region23: #{bert_base_cased_forward.23} parent=1 // pred_check_branch
      %161 = sbr.rel (0) target = $region25
    $region24: #{bert_base_cased_forward.23} parent=1 // pred_region
      %s163 = ssub.s32 32, 32
      %164 = vsyncadd [#allocation3], %s163
      %s166 = sshll.u32 [#allocation2], 4
      %s167 = int_to_ptr.vmem [resolvable:$true] %s166
      %169 = dma.vmem_to_hbm [thread:$0]  %s167, 32, %s5, [#allocation3]
    $region25: #{bert_base_cased_forward.23} parent=1 // pred_fallthru
      _
    // Predicated region
    $region26: #{bert_base_cased_forward.23} parent=1 // pred_check
      _
    $region27: #{bert_base_cased_forward.23} parent=1 // pred_check_branch
      %171 = sbr.rel (0) target = $region29
    $region28: #{bert_base_cased_forward.23} parent=1 // pred_region
      %172 = dma.done [#allocation3], 32
    $region29: #{bert_base_cased_forward.23} parent=1 // pred_fallthru
      _
    %173 = vsyncpa [#allocation3], 1

</llo_original>
